<compile_context>
chip_gen: v7x
topology: tpu7x:2x2x1
jax: 0.10.0
libtpu: 0.0.40
codegen_flags: <defaults>
</compile_context>

<pallas_src>
import functools

import jax
import jax.numpy as jnp
import numpy as np
from jax.experimental import pallas as pl
from jax.experimental.pallas import tpu as pltpu


def _round_up(x, m):
    return ((x + m - 1) // m) * m


# ---------------------------------------------------------------------------
# Kernel 1: per-(batch, spatial-tile) softmax + dice partial stats + CE
# ---------------------------------------------------------------------------
def _dice_ce_kernel(logits_ref, target_ref, stats_ref, ce_ref, cemax_ref,
                    *, s_real, masked):
    # logits_ref: (1, C, TS) f32   target_ref: (1, 1, TS) i32
    # stats_ref:  (1, C, 3) f32 accumulator (tp, sum_p, count_y)  [resident]
    # ce_ref:     (1, 1, TS) f32 per-voxel CE (lane-dense)
    # cemax_ref:  (1, 1, 1) f32 running max of CE per batch        [resident]
    s = pl.program_id(1)

    @pl.when(s == 0)
    def _():
        stats_ref[...] = jnp.zeros_like(stats_ref)
        cemax_ref[...] = jnp.zeros_like(cemax_ref)   # CE >= 0 -> 0 is a valid identity

    x = logits_ref[0]                                # (C, TS) f32
    y = target_ref[0]                                # (1, TS) i32
    C, TS = x.shape

    # numerically stable softmax over the channel (sublane) axis
    m = jnp.max(x, axis=0, keepdims=True)            # (1, TS)
    ex = jnp.exp(x - m)                              # (C, TS)
    denom = jnp.sum(ex, axis=0, keepdims=True)       # (1, TS)
    # EUP approx reciprocal + one Newton step: ~f32-exact 1/denom, divide off VALU.
    r = pl.reciprocal(denom, approx=True)
    inv = r * (2.0 - denom * r)
    p = ex * inv                                     # (C, TS)

    classes = jax.lax.broadcasted_iota(jnp.int32, (C, TS), 0)
    onehot = (classes == y).astype(jnp.float32)      # (C, TS)

    if masked:
        col = jax.lax.broadcasted_iota(jnp.int32, (1, TS), 1) + s * TS
        validf = (col < s_real).astype(jnp.float32)  # (1, TS)
        onehot_v = onehot * validf
        p_v = p * validf
    else:
        onehot_v = onehot
        p_v = p

    # Partial dice stats; fp/fn derived on host (fp = sum_p - tp, fn = count_y - tp).
    tp = jnp.sum(p * onehot_v, axis=1, keepdims=True)    # (C, 1)
    sp = jnp.sum(p_v, axis=1, keepdims=True)             # (C, 1)
    cy = jnp.sum(onehot_v, axis=1, keepdims=True)        # (C, 1)
    # Accumulate into the VMEM-resident block (HBM writeback once per batch).
    stats_ref[0, :, 0:1] += tp
    stats_ref[0, :, 1:2] += sp
    stats_ref[0, :, 2:3] += cy

    # exact per-voxel cross entropy: logsumexp(x) - x[target]
    x_y = jnp.sum(x * onehot, axis=0, keepdims=True)     # (1, TS)
    ce = (m + jnp.log(denom)) - x_y                      # (1, TS)
    if masked:
        ce = jnp.where(col < s_real, ce, jnp.float32(-1.0))   # sentinel for padding
    ce_ref[0] = ce

    tile_max = jnp.max(ce, axis=1, keepdims=True)         # (1, 1)
    cemax_ref[0] = jnp.maximum(cemax_ref[0], tile_max)


# ---------------------------------------------------------------------------
# Kernel 2: streaming histogram for the top-k threshold search
#   For every edge e_j: count(ce >= e_j) and sum(ce * [ce >= e_j]),
#   accumulated per batch element over the spatial tiles.
# ---------------------------------------------------------------------------
def _topk_hist_kernel(edges_ref, ce_ref, cnt_ref, sum_ref, *, chunk):
    # edges_ref: (NB, 1) f32   ce_ref: (1, 1, TS) f32
    # cnt_ref: (1, NB, 1) i32  sum_ref: (1, NB, 1) f32   [both resident]
    s = pl.program_id(1)

    @pl.when(s == 0)
    def _():
        cnt_ref[...] = jnp.zeros_like(cnt_ref)
        sum_ref[...] = jnp.zeros_like(sum_ref)

    e = edges_ref[...]                        # (NB, 1)
    v_all = ce_ref[0]                         # (1, TS)
    NB = e.shape[0]
    TS = v_all.shape[1]

    c_acc = jnp.zeros((NB, 1), jnp.int32)
    s_acc = jnp.zeros((NB, 1), jnp.float32)
    for i in range(TS // chunk):              # static unrolled chunk loop
        v = v_all[:, i * chunk:(i + 1) * chunk]              # (1, chunk)
        ge = v >= e                                          # (NB, chunk)
        c_acc = c_acc + jnp.sum(ge.astype(jnp.int32), axis=1, keepdims=True)
        s_acc = s_acc + jnp.sum(jnp.where(ge, v, 0.0), axis=1, keepdims=True)
    cnt_ref[0] += c_acc
    sum_ref[0] += s_acc


# ---------------------------------------------------------------------------
# Wrapper
# ---------------------------------------------------------------------------
def dc_and_topk_loss(net_output, target, *, weight_ce=1.0, weight_dice=1.0,
                     smooth=1e-5, do_bg=False, batch_dice=False, k_percent=10):
    # TODO(synk): ignore_label masking not implemented (module default ignore_label=None).
    assert target.shape[1] == 1, "target must be (B, 1, ...)"
    B, C = int(net_output.shape[0]), int(net_output.shape[1])
    S = int(np.prod(net_output.shape[2:]))

    # ---- spatial tiling (lane axis) -------------------------------------
    if S <= 2048:
        TS = _round_up(S, 128)
    else:
        TS = min(_round_up(S, 2048), 32768)
    S_pad = _round_up(S, TS)
    NS = S_pad // TS
    CHUNK = min(TS, 2048)
    masked = S_pad != S

    logits = net_output.reshape(B, C, S).astype(jnp.float32)
    tgt = target.reshape(B, 1, S).astype(jnp.int32)
    if masked:
        logits = jnp.pad(logits, ((0, 0), (0, 0), (0, S_pad - S)))
        tgt = jnp.pad(tgt, ((0, 0), (0, 0), (0, S_pad - S)))

    stats, ce, ce_max = pl.pallas_call(
        functools.partial(_dice_ce_kernel, s_real=S, masked=masked),
        grid=(B, NS),
        in_specs=[pl.BlockSpec((1, C, TS), lambda b, s: (b, 0, s)),
                  pl.BlockSpec((1, 1, TS), lambda b, s: (b, 0, s))],
        out_specs=[pl.BlockSpec((1, C, 3), lambda b, s: (b, 0, 0)),
                   pl.BlockSpec((1, 1, TS), lambda b, s: (b, 0, s)),
                   pl.BlockSpec((1, 1, 1), lambda b, s: (b, 0, 0))],
        out_shape=[jax.ShapeDtypeStruct((B, C, 3), jnp.float32),
                   jax.ShapeDtypeStruct((B, 1, S_pad), jnp.float32),
                   jax.ShapeDtypeStruct((B, 1, 1), jnp.float32)],
        compiler_params=pltpu.CompilerParams(
            dimension_semantics=("parallel", "arbitrary"),
            vmem_limit_bytes=32 * 1024 * 1024),
        cost_estimate=pl.CostEstimate(
            flops=int(B * S_pad * (10 * C + 10)),
            transcendentals=int(B * S_pad * (C + 2)),
            bytes_accessed=int(4 * B * S_pad * (C + 2) + 4 * B * (3 * C + 1))),
    )(logits, tgt)

    # ---- SoftDiceLoss epilogue (tiny (B, C) math, plain JAX glue) --------
    tp = stats[:, :, 0]
    fp = stats[:, :, 1] - tp          # sum_p   - tp
    fn = stats[:, :, 2] - tp          # count_y - tp
    if batch_dice:
        tp, fp, fn = tp.sum(0), fp.sum(0), fn.sum(0)
    dc = (2.0 * tp + smooth) / jnp.clip(2.0 * tp + fp + fn + smooth, 1e-8)
    if not do_bg:
        dc = dc[1:] if batch_dice else dc[:, 1:]
    dc_loss = -jnp.mean(dc)

    # ---- TopKLoss: streaming threshold/bucket top-k mean -----------------
    n_vox = B * S
    k_count = max(1, int(n_vox * k_percent / 100))
    NB = 128        # histogram edges per refinement pass
    PASSES = 3      # final bracket width <= max_ce / NB**PASSES

    hist_call = pl.pallas_call(
        functools.partial(_topk_hist_kernel, chunk=CHUNK),
        grid=(B, NS),
        in_specs=[pl.BlockSpec((NB, 1), lambda b, s: (0, 0)),
                  pl.BlockSpec((1, 1, TS), lambda b, s: (b, 0, s))],
        out_specs=[pl.BlockSpec((1, NB, 1), lambda b, s: (b, 0, 0)),
                   pl.BlockSpec((1, NB, 1), lambda b, s: (b, 0, 0))],
        out_shape=[jax.ShapeDtypeStruct((B, NB, 1), jnp.int32),
                   jax.ShapeDtypeStruct((B, NB, 1), jnp.float32)],
        compiler_params=pltpu.CompilerParams(
            dimension_semantics=("parallel", "arbitrary"),
            vmem_limit_bytes=32 * 1024 * 1024),
        cost_estimate=pl.CostEstimate(
            flops=int(4 * B * S_pad * NB),
            transcendentals=0,
            bytes_accessed=int(4 * B * S_pad + 4 * NB + 8 * B * NB)),
    )

    lo = jnp.float32(0.0)                                     # CE >= 0
    hi = jnp.max(ce_max) * jnp.float32(1.000001) + jnp.float32(1e-12)
    c_hi = jnp.int32(0)                                       # count(ce >= hi)
    s_hi = jnp.float32(0.0)                                   # sum (ce >= hi)
    for _ in range(PASSES):
        edges = lo + (hi - lo) * (jnp.arange(NB, dtype=jnp.float32) / NB)
        cnt_h, sum_h = hist_call(edges.reshape(NB, 1), ce)
        cnt = jnp.sum(cnt_h[:, :, 0], axis=0)                 # (NB,) int32
        sm = jnp.sum(sum_h[:, :, 0], axis=0)                  # (NB,) f32
        # largest edge that is still <= the k-th largest CE value
        jstar = jnp.sum((cnt >= k_count).astype(jnp.int32)) - 1
        j_up = jnp.minimum(jstar + 1, NB - 1)
        has_up = jstar < NB - 1
        hi_new = jnp.where(has_up, edges[j_up], hi)
        c_hi = jnp.where(has_up, cnt[j_up], c_hi)
        s_hi = jnp.where(has_up, sm[j_up], s_hi)
        lo = edges[jstar]
        hi = hi_new
    # k-th CE value lies in [lo, hi); elements >= hi are the top-c_hi values
    # (sum s_hi); approximate the remaining (k - c_hi) values (all in [lo, hi))
    # by the bracket midpoint.  |error| <= (hi - lo) / 2  (~max_ce / 128**3).
    ce_loss = (s_hi + (k_count - c_hi.astype(jnp.float32))
               * jnp.float32(0.5) * (lo + hi)) / jnp.float32(k_count)

    return weight_ce * ce_loss + weight_dice * dc_loss


# ---------------------------------------------------------------------------
# Pure-JAX reference mirroring the PyTorch forward semantics
# ---------------------------------------------------------------------------
def reference_loss(net_output, target, *, weight_ce=1.0, weight_dice=1.0,
                   smooth=1e-5, k_percent=10):
    B, C = net_output.shape[0], net_output.shape[1]
    p = jax.nn.softmax(net_output, axis=1)
    onehot = jax.nn.one_hot(target[:, 0], C, axis=1).astype(jnp.float32)
    axes = tuple(range(2, net_output.ndim))
    tp = jnp.sum(p * onehot, axis=axes)
    fp = jnp.sum(p * (1.0 - onehot), axis=axes)
    fn = jnp.sum((1.0 - p) * onehot, axis=axes)
    dc = (2.0 * tp + smooth) / jnp.clip(2.0 * tp + fp + fn + smooth, 1e-8)
    dc_loss = -jnp.mean(dc[:, 1:])
    logp = jax.nn.log_softmax(net_output, axis=1)
    ce = -jnp.take_along_axis(logp, target, axis=1)[:, 0]
    n = ce.size
    kk = max(1, int(n * k_percent / 100))
    ce_loss = jnp.mean(jax.lax.top_k(ce.reshape(-1), kk)[0])
    return weight_ce * ce_loss + weight_dice * dc_loss


if __name__ == "__main__":
    key = jax.random.PRNGKey(0)
    k1, k2 = jax.random.split(key)
    B, C, H, W = 2, 4, 16, 16
    net_output = jax.random.normal(k1, (B, C, H, W), dtype=jnp.float32)
    target = jax.random.randint(k2, (B, 1, H, W), 0, C, dtype=jnp.int32)

    loss_fn = jax.jit(dc_and_topk_loss)
    out = loss_fn(net_output, target)
    out = jax.block_until_ready(out)

    ref = reference_loss(net_output, target)
    assert np.allclose(np.asarray(out), np.asarray(ref),
                       atol=1e-4, rtol=1e-4), (float(out), float(ref))
    print("KERNEL_OK")
</pallas_src>

<mosaic_0001>
module attributes {stable_mosaic.version = 11 : i64} {
  func.func @_dice_ce_kernel(%arg0: i32, %arg1: i32, %arg2: memref<1x4x256xf32, #tpu.memory_space<vmem>>, %arg3: memref<1x1x256xi32, #tpu.memory_space<vmem>>, %arg4: memref<1x4x3xf32, #tpu.memory_space<vmem>>, %arg5: memref<1x1x256xf32, #tpu.memory_space<vmem>>, %arg6: memref<1x1x1xf32, #tpu.memory_space<vmem>>) attributes {dimension_semantics = [#tpu.dimension_semantics<parallel>, #tpu.dimension_semantics<arbitrary>], iteration_bounds = array<i64: 2, 1>, scalar_prefetch = 0 : i64, scratch_operands = 0 : i64, tpu.core_type = #tpu.core_type<tc>, window_params = [{transform_indices = @transform_0, window_bounds = array<i64: 1, 4, 256>}, {transform_indices = @transform_1, window_bounds = array<i64: 1, 1, 256>}, {transform_indices = @transform_2, window_bounds = array<i64: 1, 4, 3>}, {transform_indices = @transform_3, window_bounds = array<i64: 1, 1, 256>}, {transform_indices = @transform_4, window_bounds = array<i64: 1, 1, 1>}]} {
    %c0_i32 = arith.constant 0 : i32
    %0 = arith.cmpi eq, %arg1, %c0_i32 : i32
    %1 = arith.extui %0 : i1 to i32
    %c0_i32_0 = arith.constant 0 : i32
    %2 = arith.cmpi ne, %1, %c0_i32_0 : i32
    scf.if %2 {
      %cst_38 = arith.constant 0.000000e+00 : f32
      %68 = vector.broadcast %cst_38 : f32 to vector<1x4x3xf32>
      %c0_39 = arith.constant 0 : index
      %c0_40 = arith.constant 0 : index
      %c0_41 = arith.constant 0 : index
      %69 = vector.load %arg4[%c0_39, %c0_40, %c0_41] : memref<1x4x3xf32, #tpu.memory_space<vmem>>, vector<1x4x3xf32>
      tpu.vector_store %arg4[%c0_39, %c0_40, %c0_41], %68 {strides = array<i32>} : memref<1x4x3xf32, #tpu.memory_space<vmem>>, vector<1x4x3xf32>,
      %cst_42 = arith.constant 0.000000e+00 : f32
      %70 = vector.broadcast %cst_42 : f32 to vector<1x1x1xf32>
      %c0_43 = arith.constant 0 : index
      %c0_44 = arith.constant 0 : index
      %c0_45 = arith.constant 0 : index
      %71 = vector.load %arg6[%c0_43, %c0_44, %c0_45] : memref<1x1x1xf32, #tpu.memory_space<vmem>>, vector<1x1x1xf32>
      tpu.vector_store %arg6[%c0_43, %c0_44, %c0_45], %70 {strides = array<i32>} : memref<1x1x1xf32, #tpu.memory_space<vmem>>, vector<1x1x1xf32>,
    } else {
    }
    %c0 = arith.constant 0 : index
    %c0_1 = arith.constant 0 : index
    %c0_2 = arith.constant 0 : index
    %3 = vector.load %arg2[%c0, %c0_1, %c0_2] : memref<1x4x256xf32, #tpu.memory_space<vmem>>, vector<1x4x256xf32>
    %4 = vector.shape_cast %3 : vector<1x4x256xf32> to vector<4x256xf32>
    %c0_3 = arith.constant 0 : index
    %c0_4 = arith.constant 0 : index
    %c0_5 = arith.constant 0 : index
    %5 = vector.load %arg3[%c0_3, %c0_4, %c0_5] : memref<1x1x256xi32, #tpu.memory_space<vmem>>, vector<1x1x256xi32>
    %6 = vector.shape_cast %5 : vector<1x1x256xi32> to vector<1x256xi32>
    %cst = arith.constant dense<0xFF800000> : vector<256xf32>
    %7 = vector.multi_reduction <maximumf>, %4, %cst [0] : vector<4x256xf32> to vector<256xf32>
    %8 = vector.shape_cast %7 : vector<256xf32> to vector<1x256xf32>
    %9 = vector.broadcast %8 : vector<1x256xf32> to vector<4x256xf32>
    %10 = arith.subf %4, %9 : vector<4x256xf32>
    %11 = math.exp %10 : vector<4x256xf32>
    %cst_6 = arith.constant dense<0.000000e+00> : vector<256xf32>
    %12 = vector.multi_reduction <add>, %11, %cst_6 [0] : vector<4x256xf32> to vector<256xf32>
    %13 = vector.shape_cast %12 : vector<256xf32> to vector<1x256xf32>
    %14 = tpu.reciprocal %13 {approx = true} : vector<1x256xf32> -> vector<1x256xf32>
    %15 = arith.mulf %13, %14 : vector<1x256xf32>
    %cst_7 = arith.constant 2.000000e+00 : f32
    %16 = vector.broadcast %cst_7 : f32 to vector<1x256xf32>
    %17 = arith.subf %16, %15 : vector<1x256xf32>
    %18 = arith.mulf %14, %17 : vector<1x256xf32>
    %19 = vector.broadcast %18 : vector<1x256xf32> to vector<4x256xf32>
    %20 = arith.mulf %11, %19 : vector<4x256xf32>
    %21 = tpu.iota {dimensions = array<i32: 0>} : vector<4x256xi32>
    %22 = vector.broadcast %6 : vector<1x256xi32> to vector<4x256xi32>
    %23 = arith.cmpi eq, %21, %22 : vector<4x256xi32>
    %24 = arith.extui %23 : vector<4x256xi1> to vector<4x256xi32>
    %25 = arith.sitofp %24 : vector<4x256xi32> to vector<4x256xf32>
    %26 = arith.mulf %20, %25 : vector<4x256xf32>
    %cst_8 = arith.constant dense<0.000000e+00> : vector<4xf32>
    %27 = vector.multi_reduction <add>, %26, %cst_8 [1] : vector<4x256xf32> to vector<4xf32>
    %28 = vector.shape_cast %27 : vector<4xf32> to vector<4x1xf32>
    %cst_9 = arith.constant dense<0.000000e+00> : vector<4xf32>
    %29 = vector.multi_reduction <add>, %20, %cst_9 [1] : vector<4x256xf32> to vector<4xf32>
    %30 = vector.shape_cast %29 : vector<4xf32> to vector<4x1xf32>
    %cst_10 = arith.constant dense<0.000000e+00> : vector<4xf32>
    %31 = vector.multi_reduction <add>, %25, %cst_10 [1] : vector<4x256xf32> to vector<4xf32>
    %32 = vector.shape_cast %31 : vector<4xf32> to vector<4x1xf32>
    %c0_11 = arith.constant 0 : index
    %c0_12 = arith.constant 0 : index
    %c0_13 = arith.constant 0 : index
    %33 = vector.load %arg4[%c0_11, %c0_12, %c0_13] : memref<1x4x3xf32, #tpu.memory_space<vmem>>, vector<1x4x1xf32>
    %34 = vector.shape_cast %33 : vector<1x4x1xf32> to vector<4x1xf32>
    %35 = arith.addf %34, %28 : vector<4x1xf32>
    %c0_14 = arith.constant 0 : index
    %c0_15 = arith.constant 0 : index
    %c0_16 = arith.constant 0 : index
    %36 = vector.load %arg4[%c0_14, %c0_15, %c0_16] : memref<1x4x3xf32, #tpu.memory_space<vmem>>, vector<1x4x1xf32>
    %37 = vector.shape_cast %36 : vector<1x4x1xf32> to vector<4x1xf32>
    %38 = vector.shape_cast %35 : vector<4x1xf32> to vector<1x4x1xf32>
    tpu.vector_store %arg4[%c0_14, %c0_15, %c0_16], %38 {strides = array<i32>} : memref<1x4x3xf32, #tpu.memory_space<vmem>>, vector<1x4x1xf32>,
    %c0_17 = arith.constant 0 : index
    %c0_18 = arith.constant 0 : index
    %c1 = arith.constant 1 : index
    %39 = vector.load %arg4[%c0_17, %c0_18, %c1] : memref<1x4x3xf32, #tpu.memory_space<vmem>>, vector<1x4x1xf32>
    %40 = vector.shape_cast %39 : vector<1x4x1xf32> to vector<4x1xf32>
    %41 = arith.addf %40, %30 : vector<4x1xf32>
    %c0_19 = arith.constant 0 : index
    %c0_20 = arith.constant 0 : index
    %c1_21 = arith.constant 1 : index
    %42 = vector.load %arg4[%c0_19, %c0_20, %c1_21] : memref<1x4x3xf32, #tpu.memory_space<vmem>>, vector<1x4x1xf32>
    %43 = vector.shape_cast %42 : vector<1x4x1xf32> to vector<4x1xf32>
    %44 = vector.shape_cast %41 : vector<4x1xf32> to vector<1x4x1xf32>
    tpu.vector_store %arg4[%c0_19, %c0_20, %c1_21], %44 {strides = array<i32>} : memref<1x4x3xf32, #tpu.memory_space<vmem>>, vector<1x4x1xf32>,
    %c0_22 = arith.constant 0 : index
    %c0_23 = arith.constant 0 : index
    %c2 = arith.constant 2 : index
    %45 = vector.load %arg4[%c0_22, %c0_23, %c2] : memref<1x4x3xf32, #tpu.memory_space<vmem>>, vector<1x4x1xf32>
    %46 = vector.shape_cast %45 : vector<1x4x1xf32> to vector<4x1xf32>
    %47 = arith.addf %46, %32 : vector<4x1xf32>
    %c0_24 = arith.constant 0 : index
    %c0_25 = arith.constant 0 : index
    %c2_26 = arith.constant 2 : index
    %48 = vector.load %arg4[%c0_24, %c0_25, %c2_26] : memref<1x4x3xf32, #tpu.memory_space<vmem>>, vector<1x4x1xf32>
    %49 = vector.shape_cast %48 : vector<1x4x1xf32> to vector<4x1xf32>
    %50 = vector.shape_cast %47 : vector<4x1xf32> to vector<1x4x1xf32>
    tpu.vector_store %arg4[%c0_24, %c0_25, %c2_26], %50 {strides = array<i32>} : memref<1x4x3xf32, #tpu.memory_space<vmem>>, vector<1x4x1xf32>,
    %51 = arith.mulf %4, %25 : vector<4x256xf32>
    %cst_27 = arith.constant dense<0.000000e+00> : vector<256xf32>
    %52 = vector.multi_reduction <add>, %51, %cst_27 [0] : vector<4x256xf32> to vector<256xf32>
    %53 = vector.shape_cast %52 : vector<256xf32> to vector<1x256xf32>
    %54 = math.log %13 : vector<1x256xf32>
    %55 = arith.addf %8, %54 : vector<1x256xf32>
    %56 = arith.subf %55, %53 : vector<1x256xf32>
    %c0_28 = arith.constant 0 : index
    %c0_29 = arith.constant 0 : index
    %c0_30 = arith.constant 0 : index
    %57 = vector.load %arg5[%c0_28, %c0_29, %c0_30] : memref<1x1x256xf32, #tpu.memory_space<vmem>>, vector<1x1x256xf32>
    %58 = vector.shape_cast %57 : vector<1x1x256xf32> to vector<1x256xf32>
    %59 = vector.shape_cast %56 : vector<1x256xf32> to vector<1x1x256xf32>
    tpu.vector_store %arg5[%c0_28, %c0_29, %c0_30], %59 {strides = array<i32>} : memref<1x1x256xf32, #tpu.memory_space<vmem>>, vector<1x1x256xf32>,
    %cst_31 = arith.constant dense<0xFF800000> : vector<1xf32>
    %60 = vector.multi_reduction <maximumf>, %56, %cst_31 [1] : vector<1x256xf32> to vector<1xf32>
    %61 = vector.shape_cast %60 : vector<1xf32> to vector<1x1xf32>
    %c0_32 = arith.constant 0 : index
    %c0_33 = arith.constant 0 : index
    %c0_34 = arith.constant 0 : index
    %62 = vector.load %arg6[%c0_32, %c0_33, %c0_34] : memref<1x1x1xf32, #tpu.memory_space<vmem>>, vector<1x1x1xf32>
    %63 = vector.shape_cast %62 : vector<1x1x1xf32> to vector<1x1xf32>
    %64 = arith.maximumf %63, %61 : vector<1x1xf32>
    %c0_35 = arith.constant 0 : index
    %c0_36 = arith.constant 0 : index
    %c0_37 = arith.constant 0 : index
    %65 = vector.load %arg6[%c0_35, %c0_36, %c0_37] : memref<1x1x1xf32, #tpu.memory_space<vmem>>, vector<1x1x1xf32>
    %66 = vector.shape_cast %65 : vector<1x1x1xf32> to vector<1x1xf32>
    %67 = vector.shape_cast %64 : vector<1x1xf32> to vector<1x1x1xf32>
    tpu.vector_store %arg6[%c0_35, %c0_36, %c0_37], %67 {strides = array<i32>} : memref<1x1x1xf32, #tpu.memory_space<vmem>>, vector<1x1x1xf32>,
    return
  }
  func.func @transform_0(%arg0: i32, %arg1: i32) -> (i32, i32, i32) {
    %c0_i32 = arith.constant 0 : i32
    %c0_i32_0 = arith.constant 0 : i32
    return %arg0, %c0_i32, %arg1 : i32, i32, i32
  }
  func.func @transform_1(%arg0: i32, %arg1: i32) -> (i32, i32, i32) {
    %c0_i32 = arith.constant 0 : i32
    %c0_i32_0 = arith.constant 0 : i32
    return %arg0, %c0_i32, %arg1 : i32, i32, i32
  }
  func.func @transform_2(%arg0: i32, %arg1: i32) -> (i32, i32, i32) {
    %c0_i32 = arith.constant 0 : i32
    %c0_i32_0 = arith.constant 0 : i32
    %c0_i32_1 = arith.constant 0 : i32
    return %arg0, %c0_i32, %c0_i32_0 : i32, i32, i32
  }
  func.func @transform_3(%arg0: i32, %arg1: i32) -> (i32, i32, i32) {
    %c0_i32 = arith.constant 0 : i32
    %c0_i32_0 = arith.constant 0 : i32
    return %arg0, %c0_i32, %arg1 : i32, i32, i32
  }
  func.func @transform_4(%arg0: i32, %arg1: i32) -> (i32, i32, i32) {
    %c0_i32 = arith.constant 0 : i32
    %c0_i32_0 = arith.constant 0 : i32
    %c0_i32_1 = arith.constant 0 : i32
    return %arg0, %c0_i32, %c0_i32_0 : i32, i32, i32
  }
}

module attributes {stable_mosaic.version = 11 : i64} {
  func.func @_topk_hist_kernel(%arg0: i32, %arg1: i32, %arg2: memref<128x1xf32, #tpu.memory_space<vmem>>, %arg3: memref<1x1x256xf32, #tpu.memory_space<vmem>>, %arg4: memref<1x128x1xi32, #tpu.memory_space<vmem>>, %arg5: memref<1x128x1xf32, #tpu.memory_space<vmem>>) attributes {dimension_semantics = [#tpu.dimension_semantics<parallel>, #tpu.dimension_semantics<arbitrary>], iteration_bounds = array<i64: 2, 1>, scalar_prefetch = 0 : i64, scratch_operands = 0 : i64, tpu.core_type = #tpu.core_type<tc>, window_params = [{pipeline_mode = #tpu.pipeline_mode<synchronous>, transform_indices = @transform_0, window_bounds = array<i64: 128, 1>}, {transform_indices = @transform_1, window_bounds = array<i64: 1, 1, 256>}, {transform_indices = @transform_2, window_bounds = array<i64: 1, 128, 1>}, {transform_indices = @transform_3, window_bounds = array<i64: 1, 128, 1>}]} {
    %c0_i32 = arith.constant 0 : i32
    %0 = arith.cmpi eq, %arg1, %c0_i32 : i32
    %1 = arith.extui %0 : i1 to i32
    %c0_i32_0 = arith.constant 0 : i32
    %2 = arith.cmpi ne, %1, %c0_i32_0 : i32
    scf.if %2 {
      %c0_i32_21 = arith.constant 0 : i32
      %34 = vector.broadcast %c0_i32_21 : i32 to vector<1x128x1xi32>
      %c0_22 = arith.constant 0 : index
      %c0_23 = arith.constant 0 : index
      %c0_24 = arith.constant 0 : index
      %35 = vector.load %arg4[%c0_22, %c0_23, %c0_24] : memref<1x128x1xi32, #tpu.memory_space<vmem>>, vector<1x128x1xi32>
      tpu.vector_store %arg4[%c0_22, %c0_23, %c0_24], %34 {strides = array<i32>} : memref<1x128x1xi32, #tpu.memory_space<vmem>>, vector<1x128x1xi32>,
      %cst_25 = arith.constant 0.000000e+00 : f32
      %36 = vector.broadcast %cst_25 : f32 to vector<1x128x1xf32>
      %c0_26 = arith.constant 0 : index
      %c0_27 = arith.constant 0 : index
      %c0_28 = arith.constant 0 : index
      %37 = vector.load %arg5[%c0_26, %c0_27, %c0_28] : memref<1x128x1xf32, #tpu.memory_space<vmem>>, vector<1x128x1xf32>
      tpu.vector_store %arg5[%c0_26, %c0_27, %c0_28], %36 {strides = array<i32>} : memref<1x128x1xf32, #tpu.memory_space<vmem>>, vector<1x128x1xf32>,
    } else {
    }
    %c0 = arith.constant 0 : index
    %c0_1 = arith.constant 0 : index
    %3 = vector.load %arg2[%c0, %c0_1] : memref<128x1xf32, #tpu.memory_space<vmem>>, vector<128x1xf32>
    %c0_2 = arith.constant 0 : index
    %c0_3 = arith.constant 0 : index
    %c0_4 = arith.constant 0 : index
    %4 = vector.load %arg3[%c0_2, %c0_3, %c0_4] : memref<1x1x256xf32, #tpu.memory_space<vmem>>, vector<1x1x256xf32>
    %5 = vector.shape_cast %4 : vector<1x1x256xf32> to vector<1x256xf32>
    %c0_i32_5 = arith.constant 0 : i32
    %6 = vector.broadcast %c0_i32_5 : i32 to vector<128x1xi32>
    %cst = arith.constant 0.000000e+00 : f32
    %7 = vector.broadcast %cst : f32 to vector<128x1xf32>
    %8 = vector.broadcast %5 : vector<1x256xf32> to vector<128x256xf32>
    %9 = vector.broadcast %3 : vector<128x1xf32> to vector<128x256xf32>
    %10 = arith.cmpf oge, %8, %9 : vector<128x256xf32>
    %11 = arith.extui %10 : vector<128x256xi1> to vector<128x256xi32>
    %cst_6 = arith.constant dense<0> : vector<128xi32>
    %12 = vector.multi_reduction <add>, %11, %cst_6 [1] : vector<128x256xi32> to vector<128xi32>
    %13 = vector.shape_cast %12 : vector<128xi32> to vector<128x1xi32>
    %14 = arith.addi %6, %13 : vector<128x1xi32>
    %cst_7 = arith.constant 0.000000e+00 : f32
    %15 = vector.shape_cast %5 : vector<1x256xf32> to vector<1x256xf32>
    %16 = vector.broadcast %15 : vector<1x256xf32> to vector<128x256xf32>
    %17 = vector.broadcast %cst_7 : f32 to vector<128x256xf32>
    %18 = arith.select %10, %16, %17 : vector<128x256xi1>, vector<128x256xf32>
    %cst_8 = arith.constant dense<0.000000e+00> : vector<128xf32>
    %19 = vector.multi_reduction <add>, %18, %cst_8 [1] : vector<128x256xf32> to vector<128xf32>
    %20 = vector.shape_cast %19 : vector<128xf32> to vector<128x1xf32>
    %21 = arith.addf %7, %20 : vector<128x1xf32>
    %c0_9 = arith.constant 0 : index
    %c0_10 = arith.constant 0 : index
    %c0_11 = arith.constant 0 : index
    %22 = vector.load %arg4[%c0_9, %c0_10, %c0_11] : memref<1x128x1xi32, #tpu.memory_space<vmem>>, vector<1x128x1xi32>
    %23 = vector.shape_cast %22 : vector<1x128x1xi32> to vector<128x1xi32>
    %24 = arith.addi %23, %14 : vector<128x1xi32>
    %c0_12 = arith.constant 0 : index
    %c0_13 = arith.constant 0 : index
    %c0_14 = arith.constant 0 : index
    %25 = vector.load %arg4[%c0_12, %c0_13, %c0_14] : memref<1x128x1xi32, #tpu.memory_space<vmem>>, vector<1x128x1xi32>
    %26 = vector.shape_cast %25 : vector<1x128x1xi32> to vector<128x1xi32>
    %27 = vector.shape_cast %24 : vector<128x1xi32> to vector<1x128x1xi32>
    tpu.vector_store %arg4[%c0_12, %c0_13, %c0_14], %27 {strides = array<i32>} : memref<1x128x1xi32, #tpu.memory_space<vmem>>, vector<1x128x1xi32>,
    %c0_15 = arith.constant 0 : index
    %c0_16 = arith.constant 0 : index
    %c0_17 = arith.constant 0 : index
    %28 = vector.load %arg5[%c0_15, %c0_16, %c0_17] : memref<1x128x1xf32, #tpu.memory_space<vmem>>, vector<1x128x1xf32>
    %29 = vector.shape_cast %28 : vector<1x128x1xf32> to vector<128x1xf32>
    %30 = arith.addf %29, %21 : vector<128x1xf32>
    %c0_18 = arith.constant 0 : index
    %c0_19 = arith.constant 0 : index
    %c0_20 = arith.constant 0 : index
    %31 = vector.load %arg5[%c0_18, %c0_19, %c0_20] : memref<1x128x1xf32, #tpu.memory_space<vmem>>, vector<1x128x1xf32>
    %32 = vector.shape_cast %31 : vector<1x128x1xf32> to vector<128x1xf32>
    %33 = vector.shape_cast %30 : vector<128x1xf32> to vector<1x128x1xf32>
    tpu.vector_store %arg5[%c0_18, %c0_19, %c0_20], %33 {strides = array<i32>} : memref<1x128x1xf32, #tpu.memory_space<vmem>>, vector<1x128x1xf32>,
    return
  }
  func.func @transform_0(%arg0: i32, %arg1: i32) -> (i32, i32) {
    %c0_i32 = arith.constant 0 : i32
    %c0_i32_0 = arith.constant 0 : i32
    %c0_i32_1 = arith.constant 0 : i32
    return %c0_i32, %c0_i32_0 : i32, i32
  }
  func.func @transform_1(%arg0: i32, %arg1: i32) -> (i32, i32, i32) {
    %c0_i32 = arith.constant 0 : i32
    %c0_i32_0 = arith.constant 0 : i32
    return %arg0, %c0_i32, %arg1 : i32, i32, i32
  }
  func.func @transform_2(%arg0: i32, %arg1: i32) -> (i32, i32, i32) {
    %c0_i32 = arith.constant 0 : i32
    %c0_i32_0 = arith.constant 0 : i32
    %c0_i32_1 = arith.constant 0 : i32
    return %arg0, %c0_i32, %c0_i32_0 : i32, i32, i32
  }
  func.func @transform_3(%arg0: i32, %arg1: i32) -> (i32, i32, i32) {
    %c0_i32 = arith.constant 0 : i32
    %c0_i32_0 = arith.constant 0 : i32
    %c0_i32_1 = arith.constant 0 : i32
    return %arg0, %c0_i32, %c0_i32_0 : i32, i32, i32
  }
}

</mosaic_0001>

<llo_original>
// kernel: dc_and_topk_loss.4
$region0: #{dc_and_topk_loss.4}
  #allocation0 [shape = 'u32[]', space=smem, size = 0x4, offset = 0x4, fixed_abs, tag = 'smem constant byte address 0x4 - core index']
  #allocation1 [shape = 'u32[144,128]{1,0:T(1,128)}', space=vmem, size = 0x12000, scoped, tag = 'internal scratch']
  %s0 = inlined_call_operand.vmem [shape: f32[2,4,256], index: 0, kind: input, shape index: {}]
  %s1 = inlined_call_operand.vmem [shape: s32[2,1,256], index: 1, kind: input, shape index: {}]
  %s2 = inlined_call_operand.vmem [shape: f32[2,4,3], index: 2, kind: output, shape index: {0}]
  %s3 = inlined_call_operand.vmem [shape: f32[2,1,256], index: 3, kind: output, shape index: {1}]
  %s4 = inlined_call_operand.vmem [shape: f32[2,1,1], index: 4, kind: output, shape index: {2}]
  %5 = xla_tuple %s2, %s3, %s4
  %s6 = sld [smem:[#allocation0]]
  $region61: #{dc_and_topk_loss.4} parent=0
    _
  %s8 = ssub.s32 1, %s6
  %s9 = scalar_select 0, %s8, %s6
  loop: start=0, step=1, limit=4
  $region2: #{dc_and_topk_loss.4} parent=0 // loop_pre_header
    _
  $region3: #{dc_and_topk_loss.4} parent=0 // loop_header
    %s11 = sphi 0, %s15
    %p12 = scmp.ge.s32.totalorder %s11, 4
    %s18 = sphi 0, %s30
    %s19 = sphi 0, %s26
    %s20 = sphi 0, %s18
    %s21 = sphi 0, %s19
    %s22 = sphi 0, %s20
    %s23 = sphi 0, %s21
    %s35 = sphi 0, %s37
    %s38 = sphi 0, %s35
    %s39 = sphi 0, %s38
    %s55 = sphi 0, %s39
    %s63 = sphi 0, %s65
    %s66 = sphi 0, %s63
    %s67 = sphi 0, %s66
    %s83 = sphi 0, %s67
    %s89 = sphi 0, %s91
    %s92 = sphi 0, %s89
    %s93 = sphi 0, %s92
    %s109 = sphi 0, %s93
    %s117 = sphi 0, %s119
    %s120 = sphi 0, %s117
    %s121 = sphi 0, %s120
    %s137 = sphi 0, %s121
    %s143 = sphi 0, %s145
    %s146 = sphi 0, %s143
    %s147 = sphi 0, %s146
    %s163 = sphi 0, %s147
  $region4: #{dc_and_topk_loss.4} parent=0 // loop_header_branch
    %14 = sbr.rel (%p12) target = $region8
  $region5: #{dc_and_topk_loss.4} parent=0 // loop_body
    %s16 = ssub.s32 %s11, 1
    %s17 = ssub.s32 %s11, 2
    %s24 = sadd.s32 1, %s19
    %p25 = scmp.ge.s32.totalorder %s24, 1
    %s26 = scalar_select %p25, 0, %s24
    %s27 = sadd.s32 1, %s18
    %s28 = scalar_select %p25, %s27, %s18
    %p29 = scmp.ge.s32.totalorder %s28, 2
    %s30 = scalar_select %p29, 0, %s28
    %s31 = ssub.s32 %s18, %s30
    %s32 = ssub.s32 %s19, %s26
    %s33 = sor.u32 %s31, %s32
    %p34 = scmp.eq.s32.totalorder %s33, 0
    %s36 = sadd.s32 %s35, 1
    %s37 = scalar_select %p34, %s35, %s36
    %p40 = pneg %p34
    %p41 = scmp.eq.s32.totalorder %s11, 1
    %p42 = por %p40, %p41
    %p43 = scmp.ne.s32.totalorder %s35, %s38
    %p44 = scmp.eq.s32.totalorder %s11, 0
    %p45 = por %p43, %p44
    %p46 = scmp.ne.s32.totalorder %s35, %s38
    %p47 = scmp.eq.s32.totalorder %s16, 1
    %p48 = por %p46, %p47
    %p49 = scmp.ne.s32.totalorder %s38, %s39
    %p50 = scmp.eq.s32.totalorder %s16, 0
    %p51 = por %p49, %p50
    %p52 = scmp.ne.s32.totalorder %s38, %s39
    %p53 = scmp.eq.s32.totalorder %s17, 1
    %p54 = por %p52, %p53
    %p56 = scmp.ne.s32.totalorder %s39, %s55
    %p57 = scmp.eq.s32.totalorder %s17, 0
    %p58 = por %p56, %p57
    %s59 = ssub.s32 %s18, %s30
    %s60 = ssub.s32 %s19, %s26
    %s61 = sor.u32 %s59, %s60
    %p62 = scmp.eq.s32.totalorder %s61, 0
    %s64 = sadd.s32 %s63, 1
    %s65 = scalar_select %p62, %s63, %s64
    %p68 = pneg %p62
    %p69 = scmp.eq.s32.totalorder %s11, 1
    %p70 = por %p68, %p69
    %p71 = scmp.ne.s32.totalorder %s63, %s66
    %p72 = scmp.eq.s32.totalorder %s11, 0
    %p73 = por %p71, %p72
    %p74 = scmp.ne.s32.totalorder %s63, %s66
    %p75 = scmp.eq.s32.totalorder %s16, 1
    %p76 = por %p74, %p75
    %p77 = scmp.ne.s32.totalorder %s66, %s67
    %p78 = scmp.eq.s32.totalorder %s16, 0
    %p79 = por %p77, %p78
    %p80 = scmp.ne.s32.totalorder %s66, %s67
    %p81 = scmp.eq.s32.totalorder %s17, 1
    %p82 = por %p80, %p81
    %p84 = scmp.ne.s32.totalorder %s67, %s83
    %p85 = scmp.eq.s32.totalorder %s17, 0
    %p86 = por %p84, %p85
    %s87 = ssub.s32 %s18, %s30
    %p88 = scmp.eq.s32.totalorder %s87, 0
    %s90 = sadd.s32 %s89, 1
    %s91 = scalar_select %p88, %s89, %s90
    %p94 = pneg %p88
    %p95 = scmp.eq.s32.totalorder %s11, 1
    %p96 = por %p94, %p95
    %p97 = scmp.ne.s32.totalorder %s89, %s92
    %p98 = scmp.eq.s32.totalorder %s11, 0
    %p99 = por %p97, %p98
    %p100 = scmp.ne.s32.totalorder %s89, %s92
    %p101 = scmp.eq.s32.totalorder %s16, 1
    %p102 = por %p100, %p101
    %p103 = scmp.ne.s32.totalorder %s92, %s93
    %p104 = scmp.eq.s32.totalorder %s16, 0
    %p105 = por %p103, %p104
    %p106 = scmp.ne.s32.totalorder %s92, %s93
    %p107 = scmp.eq.s32.totalorder %s17, 1
    %p108 = por %p106, %p107
    %p110 = scmp.ne.s32.totalorder %s93, %s109
    %p111 = scmp.eq.s32.totalorder %s17, 0
    %p112 = por %p110, %p111
    %s113 = ssub.s32 %s18, %s30
    %s114 = ssub.s32 %s19, %s26
    %s115 = sor.u32 %s113, %s114
    %p116 = scmp.eq.s32.totalorder %s115, 0
    %s118 = sadd.s32 %s117, 1
    %s119 = scalar_select %p116, %s117, %s118
    %p122 = pneg %p116
    %p123 = scmp.eq.s32.totalorder %s11, 1
    %p124 = por %p122, %p123
    %p125 = scmp.ne.s32.totalorder %s117, %s120
    %p126 = scmp.eq.s32.totalorder %s11, 0
    %p127 = por %p125, %p126
    %p128 = scmp.ne.s32.totalorder %s117, %s120
    %p129 = scmp.eq.s32.totalorder %s16, 1
    %p130 = por %p128, %p129
    %p131 = scmp.ne.s32.totalorder %s120, %s121
    %p132 = scmp.eq.s32.totalorder %s16, 0
    %p133 = por %p131, %p132
    %p134 = scmp.ne.s32.totalorder %s120, %s121
    %p135 = scmp.eq.s32.totalorder %s17, 1
    %p136 = por %p134, %p135
    %p138 = scmp.ne.s32.totalorder %s121, %s137
    %p139 = scmp.eq.s32.totalorder %s17, 0
    %p140 = por %p138, %p139
    %s141 = ssub.s32 %s18, %s30
    %p142 = scmp.eq.s32.totalorder %s141, 0
    %s144 = sadd.s32 %s143, 1
    %s145 = scalar_select %p142, %s143, %s144
    %p148 = pneg %p142
    %p149 = scmp.eq.s32.totalorder %s11, 1
    %p150 = por %p148, %p149
    %p151 = scmp.ne.s32.totalorder %s143, %s146
    %p152 = scmp.eq.s32.totalorder %s11, 0
    %p153 = por %p151, %p152
    %p154 = scmp.ne.s32.totalorder %s143, %s146
    %p155 = scmp.eq.s32.totalorder %s16, 1
    %p156 = por %p154, %p155
    %p157 = scmp.ne.s32.totalorder %s146, %s147
    %p158 = scmp.eq.s32.totalorder %s16, 0
    %p159 = por %p157, %p158
    %p160 = scmp.ne.s32.totalorder %s146, %s147
    %p161 = scmp.eq.s32.totalorder %s17, 1
    %p162 = por %p160, %p161
    %p164 = scmp.ne.s32.totalorder %s147, %s163
    %p165 = scmp.eq.s32.totalorder %s17, 0
    %p166 = por %p164, %p165
    %p167 = scmp.le.s32.totalorder 1, %s11
    %p168 = scmp.lt.s32.totalorder %s11, 3
    %p169 = pnand %p167, %p168
    %p170 = pneg %p169
    // Predicated region
    $region9: #{dc_and_topk_loss.4} parent=5 // pred_check
      _
    $region10: #{dc_and_topk_loss.4} parent=5 // pred_check_branch
      %172 = sbr.rel (%p169) target = $region12
    $region11: #{dc_and_topk_loss.4} parent=5 // pred_region
      %s173 = ssub.s32 %s11, 1
    $region12: #{dc_and_topk_loss.4} parent=5 // pred_fallthru
      _
    %p174 = scmp.lt.s32.totalorder %s11, 2
    // Predicated region
    $region13: #{dc_and_topk_loss.4} parent=5 // pred_check
      %p175 = pneg %p174
    $region14: #{dc_and_topk_loss.4} parent=5 // pred_check_branch
      %177 = sbr.rel (%p175) target = $region16
    $region15: #{dc_and_topk_loss.4} parent=5 // pred_region
      // Predicated region
      $region17: #{dc_and_topk_loss.4} parent=15 // pred_check
        %p178 = pneg %p45
      $region18: #{dc_and_topk_loss.4} parent=15 // pred_check_branch
        %180 = sbr.rel (%p178) target = $region20
      $region19: #{dc_and_topk_loss.4} parent=15 // pred_region
        %s181 = smul.u32 2, %s19
        %p182 = scmp.lt.s32.totalorder %s18, 1
        %s183 = scalar_select %p182, %s18, 1
        %p184 = scmp.lt.s32.totalorder %s181, 1
        %s185 = scalar_select %p184, %s181, 1
        %s186 = smul.addr %s183, 2
        %s187 = sadd.s32 %s185, %s186
        %s188 = smul.addr %s187, 4
        %s189 = scalar_lea.vmem %s0, %s188
        %s190 = smul.u32 2, %s19
      $region20: #{dc_and_topk_loss.4} parent=15 // pred_fallthru
        _
      // Predicated region
      $region21: #{dc_and_topk_loss.4} parent=15 // pred_check
        %p191 = pneg %p73
      $region22: #{dc_and_topk_loss.4} parent=15 // pred_check_branch
        %193 = sbr.rel (%p191) target = $region24
      $region23: #{dc_and_topk_loss.4} parent=15 // pred_region
        %s194 = smul.u32 2, %s19
        %p195 = scmp.lt.s32.totalorder %s18, 1
        %s196 = scalar_select %p195, %s18, 1
        %p197 = scmp.lt.s32.totalorder %s194, 1
        %s198 = scalar_select %p197, %s194, 1
        %s199 = smul.addr %s196, 2
        %s200 = sadd.s32 %s198, %s199
        %s201 = scalar_lea.vmem %s1, %s200
        %s202 = smul.u32 2, %s19
      $region24: #{dc_and_topk_loss.4} parent=15 // pred_fallthru
        _
    $region16: #{dc_and_topk_loss.4} parent=5 // pred_fallthru
      _
    %p203 = scmp.le.s32.totalorder 1, %s11
    %p204 = scmp.lt.s32.totalorder %s11, 3
    %p205 = pnand %p203, %p204
    %p206 = pneg %p205
    // Predicated region
    $region25: #{dc_and_topk_loss.4} parent=5 // pred_check
      _
    $region26: #{dc_and_topk_loss.4} parent=5 // pred_check_branch
      %208 = sbr.rel (%p205) target = $region28
    $region27: #{dc_and_topk_loss.4} parent=5 // pred_region
      %s209 = ssub.s32 %s11, 1
      %s210 = smul.u32 2, %s21
      %p211 = scmp.lt.s32.totalorder %s20, 1
      %s212 = scalar_select %p211, %s20, 1
      %p213 = scmp.lt.s32.totalorder %s210, 1
      %s214 = scalar_select %p213, %s210, 1
      %s215 = smul.addr %s212, 2
      %s216 = sadd.s32 %s214, %s215
      %s217 = smul.addr %s216, 4
      %s218 = scalar_lea.vmem %s0, %s217
      %p219 = pneg %p51
      %p220 = pneg %p48
      %s221 = smul.u32 2, %s21
      %p222 = scmp.lt.s32.totalorder %s20, 1
      %s223 = scalar_select %p222, %s20, 1
      %p224 = scmp.lt.s32.totalorder %s221, 1
      %s225 = scalar_select %p224, %s221, 1
      %s226 = smul.addr %s223, 2
      %s227 = sadd.s32 %s225, %s226
      %s228 = scalar_lea.vmem %s1, %s227
      %p229 = pneg %p79
      %p230 = pneg %p76
      %p231 = pneg %p105
      %p232 = pneg %p102
      %p233 = scmp.lt.s32.totalorder %s20, 1
      %s234 = scalar_select %p233, %s20, 1
      %s235 = smul.addr %s234, 4
      %s236 = scalar_lea.vmem %s2, %s235
      %p237 = pneg %p133
      %p238 = pneg %p130
      %s239 = smul.u32 2, %s21
      %p240 = scmp.lt.s32.totalorder %s20, 1
      %s241 = scalar_select %p240, %s20, 1
      %p242 = scmp.lt.s32.totalorder %s239, 1
      %s243 = scalar_select %p242, %s239, 1
      %s244 = smul.addr %s241, 2
      %s245 = sadd.s32 %s243, %s244
      %s246 = scalar_lea.vmem %s3, %s245
      %p247 = pneg %p159
      %p248 = pneg %p156
      %p249 = scmp.lt.s32.totalorder %s20, 1
      %s250 = scalar_select %p249, %s20, 1
      %s251 = scalar_lea.vmem %s4, %s250
      %s252 = smul.u32 2, %s21
      %p253 = scmp.lt.s32.totalorder %s20, 1
      %s254 = scalar_select %p253, %s20, 1
      %p255 = scmp.lt.s32.totalorder %s252, 1
      %s256 = scalar_select %p255, %s252, 1
      %s257 = smul.addr %s254, 2
      %s258 = sadd.s32 %s256, %s257
      %s259 = smul.addr %s258, 4
      %s260 = scalar_lea.vmem %s0, %s259
      %s261 = smul.u32 2, %s21
      %s262 = smul.u32 2, %s21
      %p263 = scmp.lt.s32.totalorder %s20, 1
      %s264 = scalar_select %p263, %s20, 1
      %p265 = scmp.lt.s32.totalorder %s262, 1
      %s266 = scalar_select %p265, %s262, 1
      %s267 = smul.addr %s264, 2
      %s268 = sadd.s32 %s266, %s267
      %s269 = scalar_lea.vmem %s1, %s268
      %s270 = smul.u32 2, %s21
      %p271 = scmp.lt.s32.totalorder %s20, 1
      %s272 = scalar_select %p271, %s20, 1
      %s273 = smul.addr %s272, 4
      %s274 = scalar_lea.vmem %s2, %s273
      %s275 = smul.u32 2, %s21
      %p276 = scmp.lt.s32.totalorder %s20, 1
      %s277 = scalar_select %p276, %s20, 1
      %p278 = scmp.lt.s32.totalorder %s275, 1
      %s279 = scalar_select %p278, %s275, 1
      %s280 = smul.addr %s277, 2
      %s281 = sadd.s32 %s279, %s280
      %s282 = scalar_lea.vmem %s3, %s281
      %s283 = smul.u32 2, %s21
      %p284 = scmp.lt.s32.totalorder %s20, 1
      %s285 = scalar_select %p284, %s20, 1
      %s286 = scalar_lea.vmem %s4, %s285
      %p287 = scmp.eq.s32.totalorder %s21, 0
      // Predicated region
      $region29: #{dc_and_topk_loss.4} parent=27 // pred_check
        %p288 = pneg %p287
      $region30: #{dc_and_topk_loss.4} parent=27 // pred_check_branch
        %290 = sbr.rel (%p288) target = $region32
      $region31: #{dc_and_topk_loss.4} parent=27 // pred_region
        %vm291 = vcmask 19456
        %292 = vst.msk [vmem:[%s274] sm:$0xf] %vm291, 0.0
        %vm293 = vcmask 0
        %294 = vst.msk [vmem:[%s286] sm:$0x1] %vm293, 0.0
      $region32: #{dc_and_topk_loss.4} parent=27 // pred_fallthru
        _
      %v295 = vld [vmem:[%s260] sm:$0xff]
      %v296 = vld [vmem:[%s269] sm:$0x3]
      %v298 = vcombine.high %v295, %v295
      %vm300 = vcmask 1043456
      %v301 = vsel %vm300, %v295, -inf
      %v302 = vrot.slane %v301, 4
      %v303 = vmax.f32 %v301, %v302
      %v304 = vrot.slane %v303, 2
      %v305 = vmax.f32 %v303, %v304
      %v306 = vrot.slane %v305, 1
      %v307 = vmax.f32 %v305, %v306
      %v308 = vsel %vm300, %v298, -inf
      %v309 = vrot.slane %v308, 4
      %v310 = vmax.f32 %v308, %v309
      %v311 = vrot.slane %v310, 2
      %v312 = vmax.f32 %v310, %v311
      %v313 = vrot.slane %v312, 1
      %v314 = vmax.f32 %v312, %v313
      %v317 = vcombine.low %v307, %v314
      %v319 = vsub.f32 %v295, %v317
      %v320 = vmul.f32 %v319, 1.442695
      %v321 = vpow.pop %v320
      %v323 = vcombine.high %v321, %v321
      %v325 = vsel %vm300, %v321, 0.0
      %v326 = vrot.slane %v325, 4
      %v327 = vadd.f32 %v325, %v326
      %v328 = vrot.slane %v327, 2
      %v329 = vadd.f32 %v327, %v328
      %v330 = vrot.slane %v329, 1
      %v331 = vadd.f32 %v329, %v330
      %v332 = vsel %vm300, %v323, 0.0
      %v333 = vrot.slane %v332, 4
      %v334 = vadd.f32 %v332, %v333
      %v335 = vrot.slane %v334, 2
      %v336 = vadd.f32 %v334, %v335
      %v337 = vrot.slane %v336, 1
      %v338 = vadd.f32 %v336, %v337
      %v339 = vrcp.pop %v331
      %v340 = vrcp.pop %v338
      %v341 = vmul.f32 %v331, %v339
      %v342 = vmul.f32 %v338, %v340
      %v343 = vsub.f32 2.0, %v341
      %v344 = vsub.f32 2.0, %v342
      %v345 = vmul.f32 %v339, %v343
      %v346 = vmul.f32 %v340, %v344
      %v349 = vcombine.low %v345, %v346
      %v351 = vmul.f32 %v321, %v349
      %v352 = vlaneseq
      %v353 = vshrl.u32 %v352, 7
      %v354 = vlaneseq
      %v355 = vshrl.u32 %v354, 7
      %v356 = vsub.s32 0, %v355
      %v357 = vrot.slane %v296, %v356
      %v358 = vlaneseq
      %v359 = vshrl.u32 %v358, 7
      %v360 = vsub.s32 1, %v359
      %v361 = vrot.slane %v296, %v360
      %vm362 = vcmp.eq.s32.totalorder %v353, %v357
      %vm363 = vcmp.eq.s32.totalorder %v353, %v361
      %v364 = vsel %vm362, 1, 0
      %v365 = vsel %vm363, 1, 0
      %v366 = vcvt.s32.f32 %v364
      %v367 = vcvt.s32.f32 %v365
      %v370 = vcombine.low %v366, %v367
      %v372 = vmul.f32 %v351, %v370
      %v374 = vcombine.high %v372, %v372
      %v376 = vsel %vm300, %v372, 0.0
      %v377 = vsel %vm300, %v374, 0.0
      %v378 = vadd.f32 %v376, %v377
      %379 = vadd.xlane.f32.xlu0 %v378
      %v380 = vpop.xlane.xlu0 %379
      %v382 = vcombine.high %v351, %v351
      %v384 = vsel %vm300, %v351, 0.0
      %v385 = vsel %vm300, %v382, 0.0
      %v386 = vadd.f32 %v384, %v385
      %387 = vadd.xlane.f32.xlu0 %v386
      %v388 = vpop.xlane.xlu0 %387
      %v389 = vsel %vm300, %v366, 0.0
      %v390 = vsel %vm300, %v367, 0.0
      %v391 = vadd.f32 %v389, %v390
      %392 = vadd.xlane.f32.xlu0 %v391
      %v393 = vpop.xlane.xlu0 %392
      %v394 = vld [vmem:[%s274] sm:$0xf]
      %v395 = vadd.f32 %v394, %v380
      %vm396 = vcmask 3072
      %397 = vst.msk [vmem:[%s274] sm:$0xf] %vm396, %v395
      %v398 = vld [vmem:[%s274] sm:$0xf]
      %v399 = vadd.f32 %v398, %v388
      %vm400 = vcmask 11272
      %401 = vst.msk [vmem:[%s274] sm:$0xf] %vm400, %v399
      %v402 = vld [vmem:[%s274] sm:$0xf]
      %v403 = vadd.f32 %v402, %v393
      %vm404 = vcmask 19472
      %405 = vst.msk [vmem:[%s274] sm:$0xf] %vm404, %v403
      %v406 = vmul.f32 %v295, %v370
      %v408 = vcombine.high %v406, %v406
      %v410 = vsel %vm300, %v406, 0.0
      %v411 = vrot.slane %v410, 4
      %v412 = vadd.f32 %v410, %v411
      %v413 = vrot.slane %v412, 2
      %v414 = vadd.f32 %v412, %v413
      %v415 = vrot.slane %v414, 1
      %v416 = vadd.f32 %v414, %v415
      %v417 = vsel %vm300, %v408, 0.0
      %v418 = vrot.slane %v417, 4
      %v419 = vadd.f32 %v417, %v418
      %v420 = vrot.slane %v419, 2
      %v421 = vadd.f32 %v419, %v420
      %v422 = vrot.slane %v421, 1
      %v423 = vadd.f32 %v421, %v422
      %v424 = vlog2.pop %v331
      %v425 = vmul.f32 %v424, 0.6931472
      %v426 = vlog2.pop %v338
      %v427 = vmul.f32 %v426, 0.6931472
      %v428 = vadd.f32 %v307, %v425
      %v429 = vadd.f32 %v314, %v427
      %v430 = vsub.f32 %v428, %v416
      %v431 = vsub.f32 %v429, %v423
      %v434 = vcombine.low %v430, %v431
      %v436 = vunpack.c.l.s4 1966171168
      %v437 = vunpack.c.0.s8 %v436
      %v438 = vlaneseq
      %v439 = vshrl.u32 %v438, 7
      %v440 = vsub.s32 %v437, %v439
      %v441 = vrot.slane %v434, %v440
      %v443 = vunpack.c.l.s4 1966171168
      %v444 = vunpack.c.0.s8 %v443
      %v445 = vlaneseq
      %v446 = vshrl.u32 %v445, 7
      %v447 = vsub.s32 %v444, %v446
      %v448 = vrot.slane %v441, %v447
      %v450 = vlaneseq
      %vm451 = vcmp.ge.s32.totalorder %v450, 0
      %vm452 = vcmp.lt.s32.totalorder %v450, 256
      %vm453 = vmand %vm451, %vm452
      %454 = vst.msk [vmem:[%s282] sm:$0x3] %vm453, %v448
      %v455 = vmax.f32 %v430, %v431
      %456 = vmax.xlane.f32.xlu0 %v455
      %v457 = vpop.xlane.xlu0 %456
      %v458 = vld [vmem:[%s286] sm:$0x1]
      %v459 = vmax.f32 %v458, %v457
      %vm460 = vcmask 0
      %461 = vst.msk [vmem:[%s286] sm:$0x1] %vm460, %v459
      %p462 = scmp.lt.s32.totalorder %s20, 1
      %s463 = scalar_select %p462, %s20, 1
      %s464 = smul.addr %s463, 4
      %s465 = scalar_lea.vmem %s2, %s464
      %s466 = smul.u32 2, %s21
      %p467 = scmp.lt.s32.totalorder %s20, 1
      %s468 = scalar_select %p467, %s20, 1
      %p469 = scmp.lt.s32.totalorder %s466, 1
      %s470 = scalar_select %p469, %s466, 1
      %s471 = smul.addr %s468, 2
      %s472 = sadd.s32 %s470, %s471
      %s473 = scalar_lea.vmem %s3, %s472
      %p474 = scmp.lt.s32.totalorder %s20, 1
      %s475 = scalar_select %p474, %s20, 1
      %s476 = scalar_lea.vmem %s4, %s475
      // Predicated region
      $region33: #{dc_and_topk_loss.4} parent=27 // pred_check
        %p477 = pneg %p102
      $region34: #{dc_and_topk_loss.4} parent=27 // pred_check_branch
        %479 = sbr.rel (%p477) target = $region36
      $region35: #{dc_and_topk_loss.4} parent=27 // pred_region
        _
      $region36: #{dc_and_topk_loss.4} parent=27 // pred_fallthru
        _
      // Predicated region
      $region37: #{dc_and_topk_loss.4} parent=27 // pred_check
        %p480 = pneg %p130
      $region38: #{dc_and_topk_loss.4} parent=27 // pred_check_branch
        %482 = sbr.rel (%p480) target = $region40
      $region39: #{dc_and_topk_loss.4} parent=27 // pred_region
        %s483 = smul.u32 2, %s21
      $region40: #{dc_and_topk_loss.4} parent=27 // pred_fallthru
        _
      // Predicated region
      $region41: #{dc_and_topk_loss.4} parent=27 // pred_check
        %p484 = pneg %p156
      $region42: #{dc_and_topk_loss.4} parent=27 // pred_check_branch
        %486 = sbr.rel (%p484) target = $region44
      $region43: #{dc_and_topk_loss.4} parent=27 // pred_region
        _
      $region44: #{dc_and_topk_loss.4} parent=27 // pred_fallthru
        _
    $region28: #{dc_and_topk_loss.4} parent=5 // pred_fallthru
      _
    %p487 = scmp.le.s32.totalorder 2, %s11
    // Predicated region
    $region45: #{dc_and_topk_loss.4} parent=5 // pred_check
      %p488 = pneg %p487
    $region46: #{dc_and_topk_loss.4} parent=5 // pred_check_branch
      %490 = sbr.rel (%p488) target = $region48
    $region47: #{dc_and_topk_loss.4} parent=5 // pred_region
      %s491 = ssub.s32 %s11, 2
      // Predicated region
      $region49: #{dc_and_topk_loss.4} parent=47 // pred_check
        %p492 = pneg %p108
      $region50: #{dc_and_topk_loss.4} parent=47 // pred_check_branch
        %494 = sbr.rel (%p492) target = $region52
      $region51: #{dc_and_topk_loss.4} parent=47 // pred_region
        %p495 = scmp.lt.s32.totalorder %s22, 1
        %s496 = scalar_select %p495, %s22, 1
        %s497 = smul.addr %s496, 4
        %s498 = scalar_lea.vmem %s2, %s497
      $region52: #{dc_and_topk_loss.4} parent=47 // pred_fallthru
        _
      // Predicated region
      $region53: #{dc_and_topk_loss.4} parent=47 // pred_check
        %p499 = pneg %p136
      $region54: #{dc_and_topk_loss.4} parent=47 // pred_check_branch
        %501 = sbr.rel (%p499) target = $region56
      $region55: #{dc_and_topk_loss.4} parent=47 // pred_region
        %s502 = smul.u32 2, %s23
        %p503 = scmp.lt.s32.totalorder %s22, 1
        %s504 = scalar_select %p503, %s22, 1
        %p505 = scmp.lt.s32.totalorder %s502, 1
        %s506 = scalar_select %p505, %s502, 1
        %s507 = smul.addr %s504, 2
        %s508 = sadd.s32 %s506, %s507
        %s509 = scalar_lea.vmem %s3, %s508
      $region56: #{dc_and_topk_loss.4} parent=47 // pred_fallthru
        _
      // Predicated region
      $region57: #{dc_and_topk_loss.4} parent=47 // pred_check
        %p510 = pneg %p162
      $region58: #{dc_and_topk_loss.4} parent=47 // pred_check_branch
        %512 = sbr.rel (%p510) target = $region60
      $region59: #{dc_and_topk_loss.4} parent=47 // pred_region
        %p513 = scmp.lt.s32.totalorder %s22, 1
        %s514 = scalar_select %p513, %s22, 1
        %s515 = scalar_lea.vmem %s4, %s514
      $region60: #{dc_and_topk_loss.4} parent=47 // pred_fallthru
        _
    $region48: #{dc_and_topk_loss.4} parent=5 // pred_fallthru
      _
  $region6: #{dc_and_topk_loss.4} parent=0 // loop_footer
    %s15 = sadd.s32 1, %s11
  $region7: #{dc_and_topk_loss.4} parent=0 // loop_footer_branch
    %10 = sbr.rel target = $region3
  $region8: #{dc_and_topk_loss.4} parent=0 // loop_exit
    _

// kernel: dc_and_topk_loss.5
$region0: #{dc_and_topk_loss.5}
  #allocation0 [shape = 'u32[]', space=smem, size = 0x4, offset = 0x4, fixed_abs, tag = 'smem constant byte address 0x4 - core index']
  #allocation1 [shape = 'u32[144,128]{1,0:T(1,128)}', space=vmem, size = 0x12000, scoped, tag = 'internal scratch']
  %s0 = inlined_call_operand.vmem [shape: f32[128,1], index: 0, kind: input, shape index: {}]
  %s1 = inlined_call_operand.vmem [shape: f32[2,1,256], index: 1, kind: input, shape index: {}]
  %s2 = inlined_call_operand.vmem [shape: s32[2,128,1], index: 2, kind: output, shape index: {0}]
  %s3 = inlined_call_operand.vmem [shape: f32[2,128,1], index: 3, kind: output, shape index: {1}]
  %4 = xla_tuple %s2, %s3
  %s5 = sld [smem:[#allocation0]]
  $region53: #{dc_and_topk_loss.5} parent=0
    _
  %s7 = ssub.s32 1, %s5
  %s8 = scalar_select 0, %s7, %s5
  loop: start=0, step=1, limit=4
  $region2: #{dc_and_topk_loss.5} parent=0 // loop_pre_header
    _
  $region3: #{dc_and_topk_loss.5} parent=0 // loop_header
    %s10 = sphi 0, %s14
    %p11 = scmp.ge.s32.totalorder %s10, 4
    %s17 = sphi 0, %s29
    %s18 = sphi 0, %s25
    %s19 = sphi 0, %s17
    %s20 = sphi 0, %s18
    %s21 = sphi 0, %s19
    %s22 = sphi 0, %s20
    %s30 = sphi 0, %s30
    %s32 = sphi 0, %s30
    %s33 = sphi 0, %s32
    %s47 = sphi 0, %s33
    %s55 = sphi 0, %s57
    %s58 = sphi 0, %s55
    %s59 = sphi 0, %s58
    %s75 = sphi 0, %s59
    %s81 = sphi 0, %s83
    %s84 = sphi 0, %s81
    %s85 = sphi 0, %s84
    %s101 = sphi 0, %s85
    %s107 = sphi 0, %s109
    %s110 = sphi 0, %s107
    %s111 = sphi 0, %s110
    %s127 = sphi 0, %s111
  $region4: #{dc_and_topk_loss.5} parent=0 // loop_header_branch
    %13 = sbr.rel (%p11) target = $region8
  $region5: #{dc_and_topk_loss.5} parent=0 // loop_body
    %s15 = ssub.s32 %s10, 1
    %s16 = ssub.s32 %s10, 2
    %s23 = sadd.s32 1, %s18
    %p24 = scmp.ge.s32.totalorder %s23, 1
    %s25 = scalar_select %p24, 0, %s23
    %s26 = sadd.s32 1, %s17
    %s27 = scalar_select %p24, %s26, %s17
    %p28 = scmp.ge.s32.totalorder %s27, 2
    %s29 = scalar_select %p28, 0, %s27
    %s31 = sadd.s32 %s30, 1
    %p34 = scmp.eq.s32.totalorder %s10, 1
    %p35 = scmp.ne.s32.totalorder %s30, %s32
    %p36 = scmp.eq.s32.totalorder %s10, 0
    %p37 = por %p35, %p36
    %p38 = scmp.ne.s32.totalorder %s30, %s32
    %p39 = scmp.eq.s32.totalorder %s15, 1
    %p40 = por %p38, %p39
    %p41 = scmp.ne.s32.totalorder %s32, %s33
    %p42 = scmp.eq.s32.totalorder %s15, 0
    %p43 = por %p41, %p42
    %p44 = scmp.ne.s32.totalorder %s32, %s33
    %p45 = scmp.eq.s32.totalorder %s16, 1
    %p46 = por %p44, %p45
    %p48 = scmp.ne.s32.totalorder %s33, %s47
    %p49 = scmp.eq.s32.totalorder %s16, 0
    %p50 = por %p48, %p49
    %s51 = ssub.s32 %s17, %s29
    %s52 = ssub.s32 %s18, %s25
    %s53 = sor.u32 %s51, %s52
    %p54 = scmp.eq.s32.totalorder %s53, 0
    %s56 = sadd.s32 %s55, 1
    %s57 = scalar_select %p54, %s55, %s56
    %p60 = pneg %p54
    %p61 = scmp.eq.s32.totalorder %s10, 1
    %p62 = por %p60, %p61
    %p63 = scmp.ne.s32.totalorder %s55, %s58
    %p64 = scmp.eq.s32.totalorder %s10, 0
    %p65 = por %p63, %p64
    %p66 = scmp.ne.s32.totalorder %s55, %s58
    %p67 = scmp.eq.s32.totalorder %s15, 1
    %p68 = por %p66, %p67
    %p69 = scmp.ne.s32.totalorder %s58, %s59
    %p70 = scmp.eq.s32.totalorder %s15, 0
    %p71 = por %p69, %p70
    %p72 = scmp.ne.s32.totalorder %s58, %s59
    %p73 = scmp.eq.s32.totalorder %s16, 1
    %p74 = por %p72, %p73
    %p76 = scmp.ne.s32.totalorder %s59, %s75
    %p77 = scmp.eq.s32.totalorder %s16, 0
    %p78 = por %p76, %p77
    %s79 = ssub.s32 %s17, %s29
    %p80 = scmp.eq.s32.totalorder %s79, 0
    %s82 = sadd.s32 %s81, 1
    %s83 = scalar_select %p80, %s81, %s82
    %p86 = pneg %p80
    %p87 = scmp.eq.s32.totalorder %s10, 1
    %p88 = por %p86, %p87
    %p89 = scmp.ne.s32.totalorder %s81, %s84
    %p90 = scmp.eq.s32.totalorder %s10, 0
    %p91 = por %p89, %p90
    %p92 = scmp.ne.s32.totalorder %s81, %s84
    %p93 = scmp.eq.s32.totalorder %s15, 1
    %p94 = por %p92, %p93
    %p95 = scmp.ne.s32.totalorder %s84, %s85
    %p96 = scmp.eq.s32.totalorder %s15, 0
    %p97 = por %p95, %p96
    %p98 = scmp.ne.s32.totalorder %s84, %s85
    %p99 = scmp.eq.s32.totalorder %s16, 1
    %p100 = por %p98, %p99
    %p102 = scmp.ne.s32.totalorder %s85, %s101
    %p103 = scmp.eq.s32.totalorder %s16, 0
    %p104 = por %p102, %p103
    %s105 = ssub.s32 %s17, %s29
    %p106 = scmp.eq.s32.totalorder %s105, 0
    %s108 = sadd.s32 %s107, 1
    %s109 = scalar_select %p106, %s107, %s108
    %p112 = pneg %p106
    %p113 = scmp.eq.s32.totalorder %s10, 1
    %p114 = por %p112, %p113
    %p115 = scmp.ne.s32.totalorder %s107, %s110
    %p116 = scmp.eq.s32.totalorder %s10, 0
    %p117 = por %p115, %p116
    %p118 = scmp.ne.s32.totalorder %s107, %s110
    %p119 = scmp.eq.s32.totalorder %s15, 1
    %p120 = por %p118, %p119
    %p121 = scmp.ne.s32.totalorder %s110, %s111
    %p122 = scmp.eq.s32.totalorder %s15, 0
    %p123 = por %p121, %p122
    %p124 = scmp.ne.s32.totalorder %s110, %s111
    %p125 = scmp.eq.s32.totalorder %s16, 1
    %p126 = por %p124, %p125
    %p128 = scmp.ne.s32.totalorder %s111, %s127
    %p129 = scmp.eq.s32.totalorder %s16, 0
    %p130 = por %p128, %p129
    %p131 = scmp.le.s32.totalorder 1, %s10
    %p132 = scmp.lt.s32.totalorder %s10, 3
    %p133 = pnand %p131, %p132
    %p134 = pneg %p133
    // Predicated region
    $region9: #{dc_and_topk_loss.5} parent=5 // pred_check
      _
    $region10: #{dc_and_topk_loss.5} parent=5 // pred_check_branch
      %136 = sbr.rel (%p133) target = $region12
    $region11: #{dc_and_topk_loss.5} parent=5 // pred_region
      %s137 = ssub.s32 %s10, 1
      // Predicated region
      $region13: #{dc_and_topk_loss.5} parent=11 // pred_check
        %p138 = pneg %p43
      $region14: #{dc_and_topk_loss.5} parent=11 // pred_check_branch
        %140 = sbr.rel (%p138) target = $region16
      $region15: #{dc_and_topk_loss.5} parent=11 // pred_region
        _
      $region16: #{dc_and_topk_loss.5} parent=11 // pred_fallthru
        _
    $region12: #{dc_and_topk_loss.5} parent=5 // pred_fallthru
      _
    %p141 = scmp.lt.s32.totalorder %s10, 2
    // Predicated region
    $region17: #{dc_and_topk_loss.5} parent=5 // pred_check
      %p142 = pneg %p141
    $region18: #{dc_and_topk_loss.5} parent=5 // pred_check_branch
      %144 = sbr.rel (%p142) target = $region20
    $region19: #{dc_and_topk_loss.5} parent=5 // pred_region
      // Predicated region
      $region21: #{dc_and_topk_loss.5} parent=19 // pred_check
        %p145 = pneg %p65
      $region22: #{dc_and_topk_loss.5} parent=19 // pred_check_branch
        %147 = sbr.rel (%p145) target = $region24
      $region23: #{dc_and_topk_loss.5} parent=19 // pred_region
        %s148 = smul.u32 2, %s18
        %p149 = scmp.lt.s32.totalorder %s17, 1
        %s150 = scalar_select %p149, %s17, 1
        %p151 = scmp.lt.s32.totalorder %s148, 1
        %s152 = scalar_select %p151, %s148, 1
        %s153 = smul.addr %s150, 2
        %s154 = sadd.s32 %s152, %s153
        %s155 = scalar_lea.vmem %s1, %s154
        %s156 = smul.u32 2, %s18
      $region24: #{dc_and_topk_loss.5} parent=19 // pred_fallthru
        _
    $region20: #{dc_and_topk_loss.5} parent=5 // pred_fallthru
      _
    %p157 = scmp.le.s32.totalorder 1, %s10
    %p158 = scmp.lt.s32.totalorder %s10, 3
    %p159 = pnand %p157, %p158
    %p160 = pneg %p159
    // Predicated region
    $region25: #{dc_and_topk_loss.5} parent=5 // pred_check
      _
    $region26: #{dc_and_topk_loss.5} parent=5 // pred_check_branch
      %162 = sbr.rel (%p159) target = $region28
    $region27: #{dc_and_topk_loss.5} parent=5 // pred_region
      %s163 = ssub.s32 %s10, 1
      %p164 = pneg %p43
      %p165 = pneg %p40
      %s166 = smul.u32 2, %s20
      %p167 = scmp.lt.s32.totalorder %s19, 1
      %s168 = scalar_select %p167, %s19, 1
      %p169 = scmp.lt.s32.totalorder %s166, 1
      %s170 = scalar_select %p169, %s166, 1
      %s171 = smul.addr %s168, 2
      %s172 = sadd.s32 %s170, %s171
      %s173 = scalar_lea.vmem %s1, %s172
      %p174 = pneg %p71
      %p175 = pneg %p68
      %p176 = pneg %p97
      %p177 = pneg %p94
      %p178 = scmp.lt.s32.totalorder %s19, 1
      %s179 = scalar_select %p178, %s19, 1
      %s180 = smul.addr %s179, 16
      %s181 = smul.addr %s180, 8
      %s182 = scalar_lea.vmem %s2, %s181
      %p183 = pneg %p123
      %p184 = pneg %p120
      %p185 = scmp.lt.s32.totalorder %s19, 1
      %s186 = scalar_select %p185, %s19, 1
      %s187 = smul.addr %s186, 16
      %s188 = smul.addr %s187, 8
      %s189 = scalar_lea.vmem %s3, %s188
      %s190 = smul.u32 2, %s20
      %p191 = scmp.lt.s32.totalorder %s19, 1
      %s192 = scalar_select %p191, %s19, 1
      %p193 = scmp.lt.s32.totalorder %s190, 1
      %s194 = scalar_select %p193, %s190, 1
      %s195 = smul.addr %s192, 2
      %s196 = sadd.s32 %s194, %s195
      %s197 = scalar_lea.vmem %s1, %s196
      %s198 = smul.u32 2, %s20
      %p199 = scmp.lt.s32.totalorder %s19, 1
      %s200 = scalar_select %p199, %s19, 1
      %s201 = smul.addr %s200, 16
      %s202 = smul.addr %s201, 8
      %s203 = scalar_lea.vmem %s2, %s202
      %p204 = scmp.lt.s32.totalorder %s19, 1
      %s205 = scalar_select %p204, %s19, 1
      %s206 = smul.addr %s205, 16
      %s207 = smul.addr %s206, 8
      %s208 = scalar_lea.vmem %s3, %s207
      %p209 = scmp.eq.s32.totalorder %s20, 0
      // Predicated region
      $region29: #{dc_and_topk_loss.5} parent=27 // pred_check
        %p210 = pneg %p209
      $region30: #{dc_and_topk_loss.5} parent=27 // pred_check_branch
        %212 = sbr.rel (%p210) target = $region32
      $region31: #{dc_and_topk_loss.5} parent=27 // pred_region
        %vm213 = vcmask 7168
        %214 = vst.msk [vmem:[%s203] sm:$0xff] %vm213, 0
        %215 = vst.msk [vmem:[%s203 + $0x8] sm:$0xff] %vm213, 0
        %216 = vst.msk [vmem:[%s203 + $0x10] sm:$0xff] %vm213, 0
        %217 = vst.msk [vmem:[%s203 + $0x18] sm:$0xff] %vm213, 0
        %218 = vst.msk [vmem:[%s203 + $0x20] sm:$0xff] %vm213, 0
        %219 = vst.msk [vmem:[%s203 + $0x28] sm:$0xff] %vm213, 0
        %220 = vst.msk [vmem:[%s203 + $0x30] sm:$0xff] %vm213, 0
        %221 = vst.msk [vmem:[%s203 + $0x38] sm:$0xff] %vm213, 0
        %222 = vst.msk [vmem:[%s203 + $0x40] sm:$0xff] %vm213, 0
        %223 = vst.msk [vmem:[%s203 + $0x48] sm:$0xff] %vm213, 0
        %224 = vst.msk [vmem:[%s203 + $0x50] sm:$0xff] %vm213, 0
        %225 = vst.msk [vmem:[%s203 + $0x58] sm:$0xff] %vm213, 0
        %226 = vst.msk [vmem:[%s203 + $0x60] sm:$0xff] %vm213, 0
        %227 = vst.msk [vmem:[%s203 + $0x68] sm:$0xff] %vm213, 0
        %228 = vst.msk [vmem:[%s203 + $0x70] sm:$0xff] %vm213, 0
        %229 = vst.msk [vmem:[%s203 + $0x78] sm:$0xff] %vm213, 0
        %230 = vst.msk [vmem:[%s208] sm:$0xff] %vm213, 0.0
        %231 = vst.msk [vmem:[%s208 + $0x8] sm:$0xff] %vm213, 0.0
        %232 = vst.msk [vmem:[%s208 + $0x10] sm:$0xff] %vm213, 0.0
        %233 = vst.msk [vmem:[%s208 + $0x18] sm:$0xff] %vm213, 0.0
        %234 = vst.msk [vmem:[%s208 + $0x20] sm:$0xff] %vm213, 0.0
        %235 = vst.msk [vmem:[%s208 + $0x28] sm:$0xff] %vm213, 0.0
        %236 = vst.msk [vmem:[%s208 + $0x30] sm:$0xff] %vm213, 0.0
        %237 = vst.msk [vmem:[%s208 + $0x38] sm:$0xff] %vm213, 0.0
        %238 = vst.msk [vmem:[%s208 + $0x40] sm:$0xff] %vm213, 0.0
        %239 = vst.msk [vmem:[%s208 + $0x48] sm:$0xff] %vm213, 0.0
        %240 = vst.msk [vmem:[%s208 + $0x50] sm:$0xff] %vm213, 0.0
        %241 = vst.msk [vmem:[%s208 + $0x58] sm:$0xff] %vm213, 0.0
        %242 = vst.msk [vmem:[%s208 + $0x60] sm:$0xff] %vm213, 0.0
        %243 = vst.msk [vmem:[%s208 + $0x68] sm:$0xff] %vm213, 0.0
        %244 = vst.msk [vmem:[%s208 + $0x70] sm:$0xff] %vm213, 0.0
        %245 = vst.msk [vmem:[%s208 + $0x78] sm:$0xff] %vm213, 0.0
      $region32: #{dc_and_topk_loss.5} parent=27 // pred_fallthru
        _
      %v246 = vld [vmem:[%s0] sm:$0xff]
      %v247 = vld [vmem:[%s0 + $0x8] sm:$0xff]
      %v248 = vld [vmem:[%s0 + $0x10] sm:$0xff]
      %v249 = vld [vmem:[%s0 + $0x18] sm:$0xff]
      %v250 = vld [vmem:[%s0 + $0x20] sm:$0xff]
      %v251 = vld [vmem:[%s0 + $0x28] sm:$0xff]
      %v252 = vld [vmem:[%s0 + $0x30] sm:$0xff]
      %v253 = vld [vmem:[%s0 + $0x38] sm:$0xff]
      %v254 = vld [vmem:[%s0 + $0x40] sm:$0xff]
      %v255 = vld [vmem:[%s0 + $0x48] sm:$0xff]
      %v256 = vld [vmem:[%s0 + $0x50] sm:$0xff]
      %v257 = vld [vmem:[%s0 + $0x58] sm:$0xff]
      %v258 = vld [vmem:[%s0 + $0x60] sm:$0xff]
      %v259 = vld [vmem:[%s0 + $0x68] sm:$0xff]
      %v260 = vld [vmem:[%s0 + $0x70] sm:$0xff]
      %v261 = vld [vmem:[%s0 + $0x78] sm:$0xff]
      %v262 = vld [vmem:[%s197] sm:$0x3]
      %v264 = vlaneseq
      %v265 = vshrl.u32 %v264, 7
      %v266 = vsub.s32 0, %v265
      %v267 = vrot.slane %v262, %v266
      %v268 = vlaneseq
      %v269 = vshrl.u32 %v268, 7
      %v270 = vsub.s32 1, %v269
      %v271 = vrot.slane %v262, %v270
      %275 = vset.pattern.permute.xlu0 0
      %276 = vperm.xlu0 %275, %v246
      %v277 = vpop.permute.xlu0 %276
      %280 = vset.pattern.permute.xlu0 0
      %281 = vperm.xlu0 %280, %v247
      %v282 = vpop.permute.xlu0 %281
      %285 = vset.pattern.permute.xlu0 0
      %286 = vperm.xlu0 %285, %v248
      %v287 = vpop.permute.xlu0 %286
      %290 = vset.pattern.permute.xlu0 0
      %291 = vperm.xlu0 %290, %v249
      %v292 = vpop.permute.xlu0 %291
      %295 = vset.pattern.permute.xlu0 0
      %296 = vperm.xlu0 %295, %v250
      %v297 = vpop.permute.xlu0 %296
      %300 = vset.pattern.permute.xlu0 0
      %301 = vperm.xlu0 %300, %v251
      %v302 = vpop.permute.xlu0 %301
      %305 = vset.pattern.permute.xlu0 0
      %306 = vperm.xlu0 %305, %v252
      %v307 = vpop.permute.xlu0 %306
      %310 = vset.pattern.permute.xlu0 0
      %311 = vperm.xlu0 %310, %v253
      %v312 = vpop.permute.xlu0 %311
      %315 = vset.pattern.permute.xlu0 0
      %316 = vperm.xlu0 %315, %v254
      %v317 = vpop.permute.xlu0 %316
      %320 = vset.pattern.permute.xlu0 0
      %321 = vperm.xlu0 %320, %v255
      %v322 = vpop.permute.xlu0 %321
      %325 = vset.pattern.permute.xlu0 0
      %326 = vperm.xlu0 %325, %v256
      %v327 = vpop.permute.xlu0 %326
      %330 = vset.pattern.permute.xlu0 0
      %331 = vperm.xlu0 %330, %v257
      %v332 = vpop.permute.xlu0 %331
      %335 = vset.pattern.permute.xlu0 0
      %336 = vperm.xlu0 %335, %v258
      %v337 = vpop.permute.xlu0 %336
      %340 = vset.pattern.permute.xlu0 0
      %341 = vperm.xlu0 %340, %v259
      %v342 = vpop.permute.xlu0 %341
      %345 = vset.pattern.permute.xlu0 0
      %346 = vperm.xlu0 %345, %v260
      %v347 = vpop.permute.xlu0 %346
      %350 = vset.pattern.permute.xlu0 0
      %351 = vperm.xlu0 %350, %v261
      %v352 = vpop.permute.xlu0 %351
      %vm354 = vcmp.ge.f32.partialorder %v267, %v277
      %vm355 = vcmp.ge.f32.partialorder %v271, %v277
      %vm356 = vcmp.ge.f32.partialorder %v267, %v282
      %vm357 = vcmp.ge.f32.partialorder %v271, %v282
      %vm358 = vcmp.ge.f32.partialorder %v267, %v287
      %vm359 = vcmp.ge.f32.partialorder %v271, %v287
      %vm360 = vcmp.ge.f32.partialorder %v267, %v292
      %vm361 = vcmp.ge.f32.partialorder %v271, %v292
      %vm362 = vcmp.ge.f32.partialorder %v267, %v297
      %vm363 = vcmp.ge.f32.partialorder %v271, %v297
      %vm364 = vcmp.ge.f32.partialorder %v267, %v302
      %vm365 = vcmp.ge.f32.partialorder %v271, %v302
      %vm366 = vcmp.ge.f32.partialorder %v267, %v307
      %vm367 = vcmp.ge.f32.partialorder %v271, %v307
      %vm368 = vcmp.ge.f32.partialorder %v267, %v312
      %vm369 = vcmp.ge.f32.partialorder %v271, %v312
      %vm370 = vcmp.ge.f32.partialorder %v267, %v317
      %vm371 = vcmp.ge.f32.partialorder %v271, %v317
      %vm372 = vcmp.ge.f32.partialorder %v267, %v322
      %vm373 = vcmp.ge.f32.partialorder %v271, %v322
      %vm374 = vcmp.ge.f32.partialorder %v267, %v327
      %vm375 = vcmp.ge.f32.partialorder %v271, %v327
      %vm376 = vcmp.ge.f32.partialorder %v267, %v332
      %vm377 = vcmp.ge.f32.partialorder %v271, %v332
      %vm378 = vcmp.ge.f32.partialorder %v267, %v337
      %vm379 = vcmp.ge.f32.partialorder %v271, %v337
      %vm380 = vcmp.ge.f32.partialorder %v267, %v342
      %vm381 = vcmp.ge.f32.partialorder %v271, %v342
      %vm382 = vcmp.ge.f32.partialorder %v267, %v347
      %vm383 = vcmp.ge.f32.partialorder %v271, %v347
      %vm384 = vcmp.ge.f32.partialorder %v267, %v352
      %vm385 = vcmp.ge.f32.partialorder %v271, %v352
      %v386 = vsel %vm354, 1, 0
      %v387 = vsel %vm355, 1, 0
      %v388 = vsel %vm356, 1, 0
      %v389 = vsel %vm357, 1, 0
      %v390 = vsel %vm358, 1, 0
      %v391 = vsel %vm359, 1, 0
      %v392 = vsel %vm360, 1, 0
      %v393 = vsel %vm361, 1, 0
      %v394 = vsel %vm362, 1, 0
      %v395 = vsel %vm363, 1, 0
      %v396 = vsel %vm364, 1, 0
      %v397 = vsel %vm365, 1, 0
      %v398 = vsel %vm366, 1, 0
      %v399 = vsel %vm367, 1, 0
      %v400 = vsel %vm368, 1, 0
      %v401 = vsel %vm369, 1, 0
      %v402 = vsel %vm370, 1, 0
      %v403 = vsel %vm371, 1, 0
      %v404 = vsel %vm372, 1, 0
      %v405 = vsel %vm373, 1, 0
      %v406 = vsel %vm374, 1, 0
      %v407 = vsel %vm375, 1, 0
      %v408 = vsel %vm376, 1, 0
      %v409 = vsel %vm377, 1, 0
      %v410 = vsel %vm378, 1, 0
      %v411 = vsel %vm379, 1, 0
      %v412 = vsel %vm380, 1, 0
      %v413 = vsel %vm381, 1, 0
      %v414 = vsel %vm382, 1, 0
      %v415 = vsel %vm383, 1, 0
      %v416 = vsel %vm384, 1, 0
      %v417 = vsel %vm385, 1, 0
      %v418 = vadd.s32 %v386, %v387
      %v419 = vand.u32 %v418, 65535
      %v420 = vshrl.u32 %v418, 16
      %v421 = vcvt.s32.f32 %v419
      %v422 = vcvt.s32.f32 %v420
      %423 = vadd.xlane.f32.xlu0 %v421
      %v424 = vpop.xlane.xlu0 %423
      %425 = vadd.xlane.f32.xlu0 %v422
      %v426 = vpop.xlane.xlu0 %425
      %v427 = vcvt.f32.s32 %v424
      %v428 = vcvt.f32.s32 %v426
      %v429 = vshll.u32 %v428, 16
      %v430 = vadd.s32 %v429, %v427
      %v431 = vadd.s32 %v388, %v389
      %v432 = vand.u32 %v431, 65535
      %v433 = vshrl.u32 %v431, 16
      %v434 = vcvt.s32.f32 %v432
      %v435 = vcvt.s32.f32 %v433
      %436 = vadd.xlane.f32.xlu0 %v434
      %v437 = vpop.xlane.xlu0 %436
      %438 = vadd.xlane.f32.xlu0 %v435
      %v439 = vpop.xlane.xlu0 %438
      %v440 = vcvt.f32.s32 %v437
      %v441 = vcvt.f32.s32 %v439
      %v442 = vshll.u32 %v441, 16
      %v443 = vadd.s32 %v442, %v440
      %v444 = vadd.s32 %v390, %v391
      %v445 = vand.u32 %v444, 65535
      %v446 = vshrl.u32 %v444, 16
      %v447 = vcvt.s32.f32 %v445
      %v448 = vcvt.s32.f32 %v446
      %449 = vadd.xlane.f32.xlu0 %v447
      %v450 = vpop.xlane.xlu0 %449
      %451 = vadd.xlane.f32.xlu0 %v448
      %v452 = vpop.xlane.xlu0 %451
      %v453 = vcvt.f32.s32 %v450
      %v454 = vcvt.f32.s32 %v452
      %v455 = vshll.u32 %v454, 16
      %v456 = vadd.s32 %v455, %v453
      %v457 = vadd.s32 %v392, %v393
      %v458 = vand.u32 %v457, 65535
      %v459 = vshrl.u32 %v457, 16
      %v460 = vcvt.s32.f32 %v458
      %v461 = vcvt.s32.f32 %v459
      %462 = vadd.xlane.f32.xlu0 %v460
      %v463 = vpop.xlane.xlu0 %462
      %464 = vadd.xlane.f32.xlu0 %v461
      %v465 = vpop.xlane.xlu0 %464
      %v466 = vcvt.f32.s32 %v463
      %v467 = vcvt.f32.s32 %v465
      %v468 = vshll.u32 %v467, 16
      %v469 = vadd.s32 %v468, %v466
      %v470 = vadd.s32 %v394, %v395
      %v471 = vand.u32 %v470, 65535
      %v472 = vshrl.u32 %v470, 16
      %v473 = vcvt.s32.f32 %v471
      %v474 = vcvt.s32.f32 %v472
      %475 = vadd.xlane.f32.xlu0 %v473
      %v476 = vpop.xlane.xlu0 %475
      %477 = vadd.xlane.f32.xlu0 %v474
      %v478 = vpop.xlane.xlu0 %477
      %v479 = vcvt.f32.s32 %v476
      %v480 = vcvt.f32.s32 %v478
      %v481 = vshll.u32 %v480, 16
      %v482 = vadd.s32 %v481, %v479
      %v483 = vadd.s32 %v396, %v397
      %v484 = vand.u32 %v483, 65535
      %v485 = vshrl.u32 %v483, 16
      %v486 = vcvt.s32.f32 %v484
      %v487 = vcvt.s32.f32 %v485
      %488 = vadd.xlane.f32.xlu0 %v486
      %v489 = vpop.xlane.xlu0 %488
      %490 = vadd.xlane.f32.xlu0 %v487
      %v491 = vpop.xlane.xlu0 %490
      %v492 = vcvt.f32.s32 %v489
      %v493 = vcvt.f32.s32 %v491
      %v494 = vshll.u32 %v493, 16
      %v495 = vadd.s32 %v494, %v492
      %v496 = vadd.s32 %v398, %v399
      %v497 = vand.u32 %v496, 65535
      %v498 = vshrl.u32 %v496, 16
      %v499 = vcvt.s32.f32 %v497
      %v500 = vcvt.s32.f32 %v498
      %501 = vadd.xlane.f32.xlu0 %v499
      %v502 = vpop.xlane.xlu0 %501
      %503 = vadd.xlane.f32.xlu0 %v500
      %v504 = vpop.xlane.xlu0 %503
      %v505 = vcvt.f32.s32 %v502
      %v506 = vcvt.f32.s32 %v504
      %v507 = vshll.u32 %v506, 16
      %v508 = vadd.s32 %v507, %v505
      %v509 = vadd.s32 %v400, %v401
      %v510 = vand.u32 %v509, 65535
      %v511 = vshrl.u32 %v509, 16
      %v512 = vcvt.s32.f32 %v510
      %v513 = vcvt.s32.f32 %v511
      %514 = vadd.xlane.f32.xlu0 %v512
      %v515 = vpop.xlane.xlu0 %514
      %516 = vadd.xlane.f32.xlu0 %v513
      %v517 = vpop.xlane.xlu0 %516
      %v518 = vcvt.f32.s32 %v515
      %v519 = vcvt.f32.s32 %v517
      %v520 = vshll.u32 %v519, 16
      %v521 = vadd.s32 %v520, %v518
      %v522 = vadd.s32 %v402, %v403
      %v523 = vand.u32 %v522, 65535
      %v524 = vshrl.u32 %v522, 16
      %v525 = vcvt.s32.f32 %v523
      %v526 = vcvt.s32.f32 %v524
      %527 = vadd.xlane.f32.xlu0 %v525
      %v528 = vpop.xlane.xlu0 %527
      %529 = vadd.xlane.f32.xlu0 %v526
      %v530 = vpop.xlane.xlu0 %529
      %v531 = vcvt.f32.s32 %v528
      %v532 = vcvt.f32.s32 %v530
      %v533 = vshll.u32 %v532, 16
      %v534 = vadd.s32 %v533, %v531
      %v535 = vadd.s32 %v404, %v405
      %v536 = vand.u32 %v535, 65535
      %v537 = vshrl.u32 %v535, 16
      %v538 = vcvt.s32.f32 %v536
      %v539 = vcvt.s32.f32 %v537
      %540 = vadd.xlane.f32.xlu0 %v538
      %v541 = vpop.xlane.xlu0 %540
      %542 = vadd.xlane.f32.xlu0 %v539
      %v543 = vpop.xlane.xlu0 %542
      %v544 = vcvt.f32.s32 %v541
      %v545 = vcvt.f32.s32 %v543
      %v546 = vshll.u32 %v545, 16
      %v547 = vadd.s32 %v546, %v544
      %v548 = vadd.s32 %v406, %v407
      %v549 = vand.u32 %v548, 65535
      %v550 = vshrl.u32 %v548, 16
      %v551 = vcvt.s32.f32 %v549
      %v552 = vcvt.s32.f32 %v550
      %553 = vadd.xlane.f32.xlu0 %v551
      %v554 = vpop.xlane.xlu0 %553
      %555 = vadd.xlane.f32.xlu0 %v552
      %v556 = vpop.xlane.xlu0 %555
      %v557 = vcvt.f32.s32 %v554
      %v558 = vcvt.f32.s32 %v556
      %v559 = vshll.u32 %v558, 16
      %v560 = vadd.s32 %v559, %v557
      %v561 = vadd.s32 %v408, %v409
      %v562 = vand.u32 %v561, 65535
      %v563 = vshrl.u32 %v561, 16
      %v564 = vcvt.s32.f32 %v562
      %v565 = vcvt.s32.f32 %v563
      %566 = vadd.xlane.f32.xlu0 %v564
      %v567 = vpop.xlane.xlu0 %566
      %568 = vadd.xlane.f32.xlu0 %v565
      %v569 = vpop.xlane.xlu0 %568
      %v570 = vcvt.f32.s32 %v567
      %v571 = vcvt.f32.s32 %v569
      %v572 = vshll.u32 %v571, 16
      %v573 = vadd.s32 %v572, %v570
      %v574 = vadd.s32 %v410, %v411
      %v575 = vand.u32 %v574, 65535
      %v576 = vshrl.u32 %v574, 16
      %v577 = vcvt.s32.f32 %v575
      %v578 = vcvt.s32.f32 %v576
      %579 = vadd.xlane.f32.xlu0 %v577
      %v580 = vpop.xlane.xlu0 %579
      %581 = vadd.xlane.f32.xlu0 %v578
      %v582 = vpop.xlane.xlu0 %581
      %v583 = vcvt.f32.s32 %v580
      %v584 = vcvt.f32.s32 %v582
      %v585 = vshll.u32 %v584, 16
      %v586 = vadd.s32 %v585, %v583
      %v587 = vadd.s32 %v412, %v413
      %v588 = vand.u32 %v587, 65535
      %v589 = vshrl.u32 %v587, 16
      %v590 = vcvt.s32.f32 %v588
      %v591 = vcvt.s32.f32 %v589
      %592 = vadd.xlane.f32.xlu0 %v590
      %v593 = vpop.xlane.xlu0 %592
      %594 = vadd.xlane.f32.xlu0 %v591
      %v595 = vpop.xlane.xlu0 %594
      %v596 = vcvt.f32.s32 %v593
      %v597 = vcvt.f32.s32 %v595
      %v598 = vshll.u32 %v597, 16
      %v599 = vadd.s32 %v598, %v596
      %v600 = vadd.s32 %v414, %v415
      %v601 = vand.u32 %v600, 65535
      %v602 = vshrl.u32 %v600, 16
      %v603 = vcvt.s32.f32 %v601
      %v604 = vcvt.s32.f32 %v602
      %605 = vadd.xlane.f32.xlu0 %v603
      %v606 = vpop.xlane.xlu0 %605
      %607 = vadd.xlane.f32.xlu0 %v604
      %v608 = vpop.xlane.xlu0 %607
      %v609 = vcvt.f32.s32 %v606
      %v610 = vcvt.f32.s32 %v608
      %v611 = vshll.u32 %v610, 16
      %v612 = vadd.s32 %v611, %v609
      %v613 = vadd.s32 %v416, %v417
      %v614 = vand.u32 %v613, 65535
      %v615 = vshrl.u32 %v613, 16
      %v616 = vcvt.s32.f32 %v614
      %v617 = vcvt.s32.f32 %v615
      %618 = vadd.xlane.f32.xlu0 %v616
      %v619 = vpop.xlane.xlu0 %618
      %620 = vadd.xlane.f32.xlu0 %v617
      %v621 = vpop.xlane.xlu0 %620
      %v622 = vcvt.f32.s32 %v619
      %v623 = vcvt.f32.s32 %v621
      %v624 = vshll.u32 %v623, 16
      %v625 = vadd.s32 %v624, %v622
      %v626 = vsel %vm354, %v267, 0.0
      %v627 = vsel %vm355, %v271, 0.0
      %v628 = vsel %vm356, %v267, 0.0
      %v629 = vsel %vm357, %v271, 0.0
      %v630 = vsel %vm358, %v267, 0.0
      %v631 = vsel %vm359, %v271, 0.0
      %v632 = vsel %vm360, %v267, 0.0
      %v633 = vsel %vm361, %v271, 0.0
      %v634 = vsel %vm362, %v267, 0.0
      %v635 = vsel %vm363, %v271, 0.0
      %v636 = vsel %vm364, %v267, 0.0
      %v637 = vsel %vm365, %v271, 0.0
      %v638 = vsel %vm366, %v267, 0.0
      %v639 = vsel %vm367, %v271, 0.0
      %v640 = vsel %vm368, %v267, 0.0
      %v641 = vsel %vm369, %v271, 0.0
      %v642 = vsel %vm370, %v267, 0.0
      %v643 = vsel %vm371, %v271, 0.0
      %v644 = vsel %vm372, %v267, 0.0
      %v645 = vsel %vm373, %v271, 0.0
      %v646 = vsel %vm374, %v267, 0.0
      %v647 = vsel %vm375, %v271, 0.0
      %v648 = vsel %vm376, %v267, 0.0
      %v649 = vsel %vm377, %v271, 0.0
      %v650 = vsel %vm378, %v267, 0.0
      %v651 = vsel %vm379, %v271, 0.0
      %v652 = vsel %vm380, %v267, 0.0
      %v653 = vsel %vm381, %v271, 0.0
      %v654 = vsel %vm382, %v267, 0.0
      %v655 = vsel %vm383, %v271, 0.0
      %v656 = vsel %vm384, %v267, 0.0
      %v657 = vsel %vm385, %v271, 0.0
      %v658 = vadd.f32 %v626, %v627
      %659 = vadd.xlane.f32.xlu0 %v658
      %v660 = vpop.xlane.xlu0 %659
      %v661 = vadd.f32 %v628, %v629
      %662 = vadd.xlane.f32.xlu0 %v661
      %v663 = vpop.xlane.xlu0 %662
      %v664 = vadd.f32 %v630, %v631
      %665 = vadd.xlane.f32.xlu0 %v664
      %v666 = vpop.xlane.xlu0 %665
      %v667 = vadd.f32 %v632, %v633
      %668 = vadd.xlane.f32.xlu0 %v667
      %v669 = vpop.xlane.xlu0 %668
      %v670 = vadd.f32 %v634, %v635
      %671 = vadd.xlane.f32.xlu0 %v670
      %v672 = vpop.xlane.xlu0 %671
      %v673 = vadd.f32 %v636, %v637
      %674 = vadd.xlane.f32.xlu0 %v673
      %v675 = vpop.xlane.xlu0 %674
      %v676 = vadd.f32 %v638, %v639
      %677 = vadd.xlane.f32.xlu0 %v676
      %v678 = vpop.xlane.xlu0 %677
      %v679 = vadd.f32 %v640, %v641
      %680 = vadd.xlane.f32.xlu0 %v679
      %v681 = vpop.xlane.xlu0 %680
      %v682 = vadd.f32 %v642, %v643
      %683 = vadd.xlane.f32.xlu0 %v682
      %v684 = vpop.xlane.xlu0 %683
      %v685 = vadd.f32 %v644, %v645
      %686 = vadd.xlane.f32.xlu0 %v685
      %v687 = vpop.xlane.xlu0 %686
      %v688 = vadd.f32 %v646, %v647
      %689 = vadd.xlane.f32.xlu0 %v688
      %v690 = vpop.xlane.xlu0 %689
      %v691 = vadd.f32 %v648, %v649
      %692 = vadd.xlane.f32.xlu0 %v691
      %v693 = vpop.xlane.xlu0 %692
      %v694 = vadd.f32 %v650, %v651
      %695 = vadd.xlane.f32.xlu0 %v694
      %v696 = vpop.xlane.xlu0 %695
      %v697 = vadd.f32 %v652, %v653
      %698 = vadd.xlane.f32.xlu0 %v697
      %v699 = vpop.xlane.xlu0 %698
      %v700 = vadd.f32 %v654, %v655
      %701 = vadd.xlane.f32.xlu0 %v700
      %v702 = vpop.xlane.xlu0 %701
      %v703 = vadd.f32 %v656, %v657
      %704 = vadd.xlane.f32.xlu0 %v703
      %v705 = vpop.xlane.xlu0 %704
      %v706 = vadd.f32 %v660, 0.0
      %v707 = vadd.f32 %v663, 0.0
      %v708 = vadd.f32 %v666, 0.0
      %v709 = vadd.f32 %v669, 0.0
      %v710 = vadd.f32 %v672, 0.0
      %v711 = vadd.f32 %v675, 0.0
      %v712 = vadd.f32 %v678, 0.0
      %v713 = vadd.f32 %v681, 0.0
      %v714 = vadd.f32 %v684, 0.0
      %v715 = vadd.f32 %v687, 0.0
      %v716 = vadd.f32 %v690, 0.0
      %v717 = vadd.f32 %v693, 0.0
      %v718 = vadd.f32 %v696, 0.0
      %v719 = vadd.f32 %v699, 0.0
      %v720 = vadd.f32 %v702, 0.0
      %v721 = vadd.f32 %v705, 0.0
      %v722 = vld [vmem:[%s203] sm:$0xff]
      %v723 = vld [vmem:[%s203 + $0x8] sm:$0xff]
      %v724 = vld [vmem:[%s203 + $0x10] sm:$0xff]
      %v725 = vld [vmem:[%s203 + $0x18] sm:$0xff]
      %v726 = vld [vmem:[%s203 + $0x20] sm:$0xff]
      %v727 = vld [vmem:[%s203 + $0x28] sm:$0xff]
      %v728 = vld [vmem:[%s203 + $0x30] sm:$0xff]
      %v729 = vld [vmem:[%s203 + $0x38] sm:$0xff]
      %v730 = vld [vmem:[%s203 + $0x40] sm:$0xff]
      %v731 = vld [vmem:[%s203 + $0x48] sm:$0xff]
      %v732 = vld [vmem:[%s203 + $0x50] sm:$0xff]
      %v733 = vld [vmem:[%s203 + $0x58] sm:$0xff]
      %v734 = vld [vmem:[%s203 + $0x60] sm:$0xff]
      %v735 = vld [vmem:[%s203 + $0x68] sm:$0xff]
      %v736 = vld [vmem:[%s203 + $0x70] sm:$0xff]
      %v737 = vld [vmem:[%s203 + $0x78] sm:$0xff]
      %v738 = vadd.s32 %v722, %v430
      %v739 = vadd.s32 %v723, %v443
      %v740 = vadd.s32 %v724, %v456
      %v741 = vadd.s32 %v725, %v469
      %v742 = vadd.s32 %v726, %v482
      %v743 = vadd.s32 %v727, %v495
      %v744 = vadd.s32 %v728, %v508
      %v745 = vadd.s32 %v729, %v521
      %v746 = vadd.s32 %v730, %v534
      %v747 = vadd.s32 %v731, %v547
      %v748 = vadd.s32 %v732, %v560
      %v749 = vadd.s32 %v733, %v573
      %v750 = vadd.s32 %v734, %v586
      %v751 = vadd.s32 %v735, %v599
      %v752 = vadd.s32 %v736, %v612
      %v753 = vadd.s32 %v737, %v625
      %vm754 = vcmask 7168
      %755 = vst.msk [vmem:[%s203] sm:$0xff] %vm754, %v738
      %756 = vst.msk [vmem:[%s203 + $0x8] sm:$0xff] %vm754, %v739
      %757 = vst.msk [vmem:[%s203 + $0x10] sm:$0xff] %vm754, %v740
      %758 = vst.msk [vmem:[%s203 + $0x18] sm:$0xff] %vm754, %v741
      %759 = vst.msk [vmem:[%s203 + $0x20] sm:$0xff] %vm754, %v742
      %760 = vst.msk [vmem:[%s203 + $0x28] sm:$0xff] %vm754, %v743
      %761 = vst.msk [vmem:[%s203 + $0x30] sm:$0xff] %vm754, %v744
      %762 = vst.msk [vmem:[%s203 + $0x38] sm:$0xff] %vm754, %v745
      %763 = vst.msk [vmem:[%s203 + $0x40] sm:$0xff] %vm754, %v746
      %764 = vst.msk [vmem:[%s203 + $0x48] sm:$0xff] %vm754, %v747
      %765 = vst.msk [vmem:[%s203 + $0x50] sm:$0xff] %vm754, %v748
      %766 = vst.msk [vmem:[%s203 + $0x58] sm:$0xff] %vm754, %v749
      %767 = vst.msk [vmem:[%s203 + $0x60] sm:$0xff] %vm754, %v750
      %768 = vst.msk [vmem:[%s203 + $0x68] sm:$0xff] %vm754, %v751
      %769 = vst.msk [vmem:[%s203 + $0x70] sm:$0xff] %vm754, %v752
      %770 = vst.msk [vmem:[%s203 + $0x78] sm:$0xff] %vm754, %v753
      %v771 = vld [vmem:[%s208] sm:$0xff]
      %v772 = vld [vmem:[%s208 + $0x8] sm:$0xff]
      %v773 = vld [vmem:[%s208 + $0x10] sm:$0xff]
      %v774 = vld [vmem:[%s208 + $0x18] sm:$0xff]
      %v775 = vld [vmem:[%s208 + $0x20] sm:$0xff]
      %v776 = vld [vmem:[%s208 + $0x28] sm:$0xff]
      %v777 = vld [vmem:[%s208 + $0x30] sm:$0xff]
      %v778 = vld [vmem:[%s208 + $0x38] sm:$0xff]
      %v779 = vld [vmem:[%s208 + $0x40] sm:$0xff]
      %v780 = vld [vmem:[%s208 + $0x48] sm:$0xff]
      %v781 = vld [vmem:[%s208 + $0x50] sm:$0xff]
      %v782 = vld [vmem:[%s208 + $0x58] sm:$0xff]
      %v783 = vld [vmem:[%s208 + $0x60] sm:$0xff]
      %v784 = vld [vmem:[%s208 + $0x68] sm:$0xff]
      %v785 = vld [vmem:[%s208 + $0x70] sm:$0xff]
      %v786 = vld [vmem:[%s208 + $0x78] sm:$0xff]
      %v787 = vadd.f32 %v771, %v706
      %v788 = vadd.f32 %v772, %v707
      %v789 = vadd.f32 %v773, %v708
      %v790 = vadd.f32 %v774, %v709
      %v791 = vadd.f32 %v775, %v710
      %v792 = vadd.f32 %v776, %v711
      %v793 = vadd.f32 %v777, %v712
      %v794 = vadd.f32 %v778, %v713
      %v795 = vadd.f32 %v779, %v714
      %v796 = vadd.f32 %v780, %v715
      %v797 = vadd.f32 %v781, %v716
      %v798 = vadd.f32 %v782, %v717
      %v799 = vadd.f32 %v783, %v718
      %v800 = vadd.f32 %v784, %v719
      %v801 = vadd.f32 %v785, %v720
      %v802 = vadd.f32 %v786, %v721
      %803 = vst.msk [vmem:[%s208] sm:$0xff] %vm754, %v787
      %804 = vst.msk [vmem:[%s208 + $0x8] sm:$0xff] %vm754, %v788
      %805 = vst.msk [vmem:[%s208 + $0x10] sm:$0xff] %vm754, %v789
      %806 = vst.msk [vmem:[%s208 + $0x18] sm:$0xff] %vm754, %v790
      %807 = vst.msk [vmem:[%s208 + $0x20] sm:$0xff] %vm754, %v791
      %808 = vst.msk [vmem:[%s208 + $0x28] sm:$0xff] %vm754, %v792
      %809 = vst.msk [vmem:[%s208 + $0x30] sm:$0xff] %vm754, %v793
      %810 = vst.msk [vmem:[%s208 + $0x38] sm:$0xff] %vm754, %v794
      %811 = vst.msk [vmem:[%s208 + $0x40] sm:$0xff] %vm754, %v795
      %812 = vst.msk [vmem:[%s208 + $0x48] sm:$0xff] %vm754, %v796
      %813 = vst.msk [vmem:[%s208 + $0x50] sm:$0xff] %vm754, %v797
      %814 = vst.msk [vmem:[%s208 + $0x58] sm:$0xff] %vm754, %v798
      %815 = vst.msk [vmem:[%s208 + $0x60] sm:$0xff] %vm754, %v799
      %816 = vst.msk [vmem:[%s208 + $0x68] sm:$0xff] %vm754, %v800
      %817 = vst.msk [vmem:[%s208 + $0x70] sm:$0xff] %vm754, %v801
      %818 = vst.msk [vmem:[%s208 + $0x78] sm:$0xff] %vm754, %v802
      %p819 = scmp.lt.s32.totalorder %s19, 1
      %s820 = scalar_select %p819, %s19, 1
      %s821 = smul.addr %s820, 16
      %s822 = smul.addr %s821, 8
      %s823 = scalar_lea.vmem %s2, %s822
      %p824 = scmp.lt.s32.totalorder %s19, 1
      %s825 = scalar_select %p824, %s19, 1
      %s826 = smul.addr %s825, 16
      %s827 = smul.addr %s826, 8
      %s828 = scalar_lea.vmem %s3, %s827
      // Predicated region
      $region33: #{dc_and_topk_loss.5} parent=27 // pred_check
        %p829 = pneg %p94
      $region34: #{dc_and_topk_loss.5} parent=27 // pred_check_branch
        %831 = sbr.rel (%p829) target = $region36
      $region35: #{dc_and_topk_loss.5} parent=27 // pred_region
        _
      $region36: #{dc_and_topk_loss.5} parent=27 // pred_fallthru
        _
      // Predicated region
      $region37: #{dc_and_topk_loss.5} parent=27 // pred_check
        %p832 = pneg %p120
      $region38: #{dc_and_topk_loss.5} parent=27 // pred_check_branch
        %834 = sbr.rel (%p832) target = $region40
      $region39: #{dc_and_topk_loss.5} parent=27 // pred_region
        _
      $region40: #{dc_and_topk_loss.5} parent=27 // pred_fallthru
        _
    $region28: #{dc_and_topk_loss.5} parent=5 // pred_fallthru
      _
    %p835 = scmp.le.s32.totalorder 2, %s10
    // Predicated region
    $region41: #{dc_and_topk_loss.5} parent=5 // pred_check
      %p836 = pneg %p835
    $region42: #{dc_and_topk_loss.5} parent=5 // pred_check_branch
      %838 = sbr.rel (%p836) target = $region44
    $region43: #{dc_and_topk_loss.5} parent=5 // pred_region
      %s839 = ssub.s32 %s10, 2
      // Predicated region
      $region45: #{dc_and_topk_loss.5} parent=43 // pred_check
        %p840 = pneg %p100
      $region46: #{dc_and_topk_loss.5} parent=43 // pred_check_branch
        %842 = sbr.rel (%p840) target = $region48
      $region47: #{dc_and_topk_loss.5} parent=43 // pred_region
        %p843 = scmp.lt.s32.totalorder %s21, 1
        %s844 = scalar_select %p843, %s21, 1
        %s845 = smul.addr %s844, 16
        %s846 = smul.addr %s845, 8
        %s847 = scalar_lea.vmem %s2, %s846
      $region48: #{dc_and_topk_loss.5} parent=43 // pred_fallthru
        _
      // Predicated region
      $region49: #{dc_and_topk_loss.5} parent=43 // pred_check
        %p848 = pneg %p126
      $region50: #{dc_and_topk_loss.5} parent=43 // pred_check_branch
        %850 = sbr.rel (%p848) target = $region52
      $region51: #{dc_and_topk_loss.5} parent=43 // pred_region
        %p851 = scmp.lt.s32.totalorder %s21, 1
        %s852 = scalar_select %p851, %s21, 1
        %s853 = smul.addr %s852, 16
        %s854 = smul.addr %s853, 8
        %s855 = scalar_lea.vmem %s3, %s854
      $region52: #{dc_and_topk_loss.5} parent=43 // pred_fallthru
        _
    $region44: #{dc_and_topk_loss.5} parent=5 // pred_fallthru
      _
  $region6: #{dc_and_topk_loss.5} parent=0 // loop_footer
    %s14 = sadd.s32 1, %s10
  $region7: #{dc_and_topk_loss.5} parent=0 // loop_footer_branch
    %9 = sbr.rel target = $region3
  $region8: #{dc_and_topk_loss.5} parent=0 // loop_exit
    _

</llo_original>
